<compile_context>
chip_gen: v5e
topology: v5e:2x2
jax: 0.10.0
libtpu: 0.0.40
codegen_flags: <defaults>
</compile_context>

<pallas_src>
import functools

import jax
import jax.numpy as jnp
from jax.experimental import pallas as pl
from jax.experimental.pallas import tpu as pltpu


_PAD = 128  # lane-aligned left offset of the activation inside the scratch line


# ---------------------------------------------------------------------------
# Fused Pallas kernel: 2 residual blocks + downsample shortcut + AvgPool2d(2)
# ---------------------------------------------------------------------------

def _fused_resnet_kernel(x_ref,
                         w1a_ref, b1a_ref, w1b_ref, b1b_ref,
                         w2a_ref, b2a_ref, w2b_ref, b2b_ref,
                         wd_ref, bd_ref,
                         m16_ref, m8_ref, sub_ref, pool_ref,
                         o_ref, line_ref, *, B, H, W):
    """Whole forward pass on one lane-dense [C, B*H*W] tile (VMEM resident)."""
    H2, W2 = H // 2, W // 2
    M1 = B * H * W          # flattened spatial size at full resolution
    M2 = B * H2 * W2        # after the stride-2 stage

    def im2col(x_val, masks_ref, m, width):
        """[C, m] activation -> [9C, m] patch matrix.

        Stages the activation into the zero-padded scratch line at the
        lane-aligned offset _PAD, reads the 9 taps as static-offset window
        loads, masks row/image border wrap-around and concatenates along
        sublanes (each piece is exactly one 8-sublane tile).
        """
        line_ref[...] = jnp.zeros_like(line_ref)
        line_ref[:, _PAD:_PAD + m] = x_val
        taps = []
        for kh in range(3):
            for kw in range(3):
                off = (kh - 1) * width + (kw - 1)
                k = kh * 3 + kw
                window = line_ref[:, _PAD + off:_PAD + off + m]      # [C, m]
                taps.append(window * masks_ref[k:k + 1, :])          # mask wraps
        return jnp.concatenate(taps, axis=0)                         # [9C, m]

    def matmul_bn(patches, w_ref, b_ref):
        """MXU matmul against scale-folded [C, 9C] weights + BN shift."""
        acc = jnp.dot(w_ref[...], patches, preferred_element_type=jnp.float32)
        return acc + b_ref[...]                                      # [C, m]

    x = x_ref[...]                                                   # [C, M1]

    # ---- residual block 0: stride 1, identity shortcut (full resolution) ----
    p = im2col(x, m16_ref, M1, W)
    h = jnp.maximum(matmul_bn(p, w1a_ref, b1a_ref), 0.0)
    p = im2col(h, m16_ref, M1, W)
    h = matmul_bn(p, w1b_ref, b1b_ref)
    y1 = jnp.maximum(h + x, 0.0)

    # ---- residual block 1: stride 2, conv3x3(s2)+BN shortcut ----
    # Both stride-2 convs (main path conv1 and the downsample) reuse the same
    # im2col patches of y1; they are evaluated at full resolution and then
    # subsampled with the one-hot selection matmul `sub` (identical to a
    # stride-2 conv with padding=1).
    sub = sub_ref[...]                                               # [M1, M2]
    p = im2col(y1, m16_ref, M1, W)
    c1 = jnp.maximum(matmul_bn(p, w2a_ref, b2a_ref), 0.0)
    u = jnp.dot(c1, sub, preferred_element_type=jnp.float32)         # [C, M2]
    d = jnp.dot(matmul_bn(p, wd_ref, bd_ref), sub,
                preferred_element_type=jnp.float32)                  # shortcut
    p = im2col(u, m8_ref, M2, W2)
    v = matmul_bn(p, w2b_ref, b2b_ref)
    z = jnp.maximum(v + d, 0.0)                                      # [C, M2]

    # ---- AvgPool2d(2) as a pooling matmul ----
    o_ref[...] = jnp.dot(z, pool_ref[...], preferred_element_type=jnp.float32)


# ---------------------------------------------------------------------------
# Host-side prep: weight folding, border masks, subsample / pool matrices
# ---------------------------------------------------------------------------

def _fold_conv_bn(w_oihw, scale):
    """Torch-layout [Cout, Cin, 3, 3] weights -> [Cout, 9*Cin] matrix whose K
    ordering matches the kernel tap concat ((kh, kw) major, Cin minor), with
    the eval-mode BatchNorm scale folded in offline."""
    co, ci = w_oihw.shape[0], w_oihw.shape[1]
    w = jnp.transpose(w_oihw, (0, 2, 3, 1)).reshape(co, 9 * ci)
    return (w * scale[:, None]).astype(jnp.float32)


def _tap_masks(B, H, W):
    """[9, B*H*W] {0,1} masks: tap (kh, kw) of the flattened layout is valid
    unless the shifted pixel leaves the HxW image (covers both row wrap and
    batch wrap of the flat index)."""
    y = jnp.arange(H)
    x = jnp.arange(W)
    rows = []
    for kh in range(3):
        for kw in range(3):
            dy, dx = kh - 1, kw - 1
            vy = (y + dy >= 0) & (y + dy < H)
            vx = (x + dx >= 0) & (x + dx < W)
            m = (vy[:, None] & vx[None, :]).astype(jnp.float32).reshape(H * W)
            rows.append(jnp.tile(m, B))
    return jnp.stack(rows, axis=0)


def _subsample_matrix(B, H, W):
    """[B*H*W, B*(H//2)*(W//2)] one-hot matrix: right-multiplying a [C, B*H*W]
    map keeps every second row/column (== stride-2 conv output positions)."""
    Ho, Wo = H // 2, W // 2
    mo = jnp.arange(B * Ho * Wo)
    b = mo // (Ho * Wo)
    r = mo % (Ho * Wo)
    yo, xo = r // Wo, r % Wo
    mi = b * H * W + (2 * yo) * W + (2 * xo)
    return jnp.transpose(jax.nn.one_hot(mi, B * H * W, dtype=jnp.float32))


def _avgpool_matrix(B, H, W):
    """[B*H*W, B*(H//2)*(W//2)] matrix implementing AvgPool2d(2)."""
    Ho, Wo = H // 2, W // 2
    mo = jnp.arange(B * Ho * Wo)
    b = mo // (Ho * Wo)
    r = mo % (Ho * Wo)
    yo, xo = r // Wo, r % Wo
    parts = []
    for dy in (0, 1):
        for dx in (0, 1):
            mi = b * H * W + (2 * yo + dy) * W + (2 * xo + dx)
            parts.append(jax.nn.one_hot(mi, B * H * W, dtype=jnp.float32))
    return 0.25 * jnp.transpose(sum(parts))


# ---------------------------------------------------------------------------
# Forward pass wrapper (single pallas_call)
# ---------------------------------------------------------------------------

def resnet_forward(x_nchw, params):
    """ResNet.forward (layers=[1, 1]) + AvgPool2d(2). NCHW in -> NCHW out."""
    B, C, H, W = x_nchw.shape
    assert H % 4 == 0 and W % 4 == 0, "two 2x downsamplings required"
    M1, M2, M3 = B * H * W, (B * H * W) // 4, (B * H * W) // 16

    # Lane-dense [C, B*H*W]: channels on sublanes, flat spatial on lanes.
    x_flat = jnp.transpose(x_nchw, (1, 0, 2, 3)).reshape(C, M1).astype(jnp.float32)

    b0, b1 = params['block0'], params['block1']
    args = (
        x_flat,
        _fold_conv_bn(b0['w1'], b0['s1']), b0['b1'].reshape(C, 1).astype(jnp.float32),
        _fold_conv_bn(b0['w2'], b0['s2']), b0['b2'].reshape(C, 1).astype(jnp.float32),
        _fold_conv_bn(b1['w1'], b1['s1']), b1['b1'].reshape(C, 1).astype(jnp.float32),
        _fold_conv_bn(b1['w2'], b1['s2']), b1['b2'].reshape(C, 1).astype(jnp.float32),
        _fold_conv_bn(b1['wd'], b1['sd']), b1['bd'].reshape(C, 1).astype(jnp.float32),
        _tap_masks(B, H, W),                 # [9, M1]
        _tap_masks(B, H // 2, W // 2),       # [9, M2]
        _subsample_matrix(B, H, W),          # [M1, M2]
        _avgpool_matrix(B, H // 2, W // 2),  # [M2, M3]
    )

    vmem = pl.BlockSpec(memory_space=pltpu.MemorySpace.VMEM)
    flops = (4 * 2 * C * 9 * C * M1        # four full-resolution 3x3 convs
             + 2 * C * 9 * C * M2          # one half-resolution 3x3 conv
             + 2 * 2 * C * M1 * M2         # two stride-2 selection matmuls
             + 2 * C * M2 * M3)            # pooling matmul
    bytes_accessed = 4 * (C * M1 + 5 * 9 * C * C + 5 * C + 9 * (M1 + M2)
                          + M1 * M2 + M2 * M3 + C * M3)

    out_flat = pl.pallas_call(
        functools.partial(_fused_resnet_kernel, B=B, H=H, W=W),
        out_shape=jax.ShapeDtypeStruct((C, M3), jnp.float32),
        in_specs=[vmem] * len(args),
        out_specs=vmem,
        scratch_shapes=[pltpu.VMEM((C, _PAD + M1 + _PAD), jnp.float32)],
        cost_estimate=pl.CostEstimate(flops=int(flops), transcendentals=0,
                                      bytes_accessed=int(bytes_accessed)),
    )(*args)

    Ho, Wo = H // 4, W // 4
    return jnp.transpose(out_flat.reshape(C, B, Ho, Wo), (1, 0, 2, 3))


# ---------------------------------------------------------------------------
# Pure-JAX reference (for verification) and deterministic synthetic params
# ---------------------------------------------------------------------------

def resnet_reference(x, params):
    """Reference forward with lax.conv + eval-mode BN (NCHW)."""
    def conv_bn(x, w, scale, shift, stride):
        y = jax.lax.conv_general_dilated(
            x, w, window_strides=(stride, stride), padding=((1, 1), (1, 1)),
            dimension_numbers=('NCHW', 'OIHW', 'NCHW'),
            precision=jax.lax.Precision.HIGHEST)
        return y * scale[None, :, None, None] + shift[None, :, None, None]

    b0, b1 = params['block0'], params['block1']
    h = jax.nn.relu(conv_bn(x, b0['w1'], b0['s1'], b0['b1'], 1))
    h = conv_bn(h, b0['w2'], b0['s2'], b0['b2'], 1)
    x1 = jax.nn.relu(h + x)

    h = jax.nn.relu(conv_bn(x1, b1['w1'], b1['s1'], b1['b1'], 2))
    h = conv_bn(h, b1['w2'], b1['s2'], b1['b2'], 1)
    res = conv_bn(x1, b1['wd'], b1['sd'], b1['bd'], 2)
    x2 = jax.nn.relu(h + res)

    B, C, H, W = x2.shape
    return x2.reshape(B, C, H // 2, 2, W // 2, 2).mean(axis=(3, 5))


def _make_conv(key, cin, cout):
    w = jax.random.normal(key, (cout, cin, 3, 3), jnp.float32)
    return w * (2.0 / (9 * cin)) ** 0.5


def _make_bn(key, c):
    k1, k2 = jax.random.split(key)
    gamma = 1.0 + 0.1 * jax.random.normal(k1, (c,), jnp.float32)
    beta = 0.1 * jax.random.normal(k2, (c,), jnp.float32)
    # eval-mode BN (running_mean=0, running_var=1) -> per-channel scale/shift
    scale = gamma / jnp.sqrt(1.0 + 1e-5)
    return scale, beta


def make_resnet_params(key, c):
    """config['conv4-num-filter'] = c; ResNet(config, ResidualBlock, [1, 1])."""
    ks = jax.random.split(key, 10)
    s1a, b1a = _make_bn(ks[1], c)
    s1b, b1b = _make_bn(ks[3], c)
    s2a, b2a = _make_bn(ks[5], c)
    s2b, b2b = _make_bn(ks[7], c)
    sd, bd = _make_bn(ks[9], c)
    return {
        'block0': {'w1': _make_conv(ks[0], c, c), 's1': s1a, 'b1': b1a,
                   'w2': _make_conv(ks[2], c, c), 's2': s1b, 'b2': b1b},
        'block1': {'w1': _make_conv(ks[4], c, c), 's1': s2a, 'b1': b2a,
                   'w2': _make_conv(ks[6], c, c), 's2': s2b, 'b2': b2b,
                   'wd': _make_conv(ks[8], c, c), 'sd': sd, 'bd': bd},
    }


# ---------------------------------------------------------------------------

if __name__ == "__main__":
    key = jax.random.PRNGKey(0)
    k_params, k_x = jax.random.split(key)

    # config['conv4-num-filter'] = 8 ; ResNet(config, ResidualBlock, layers=[1, 1])
    NUM_FILTERS = 8
    B, H, W = 2, 16, 16

    params = make_resnet_params(k_params, NUM_FILTERS)
    x = jax.random.normal(k_x, (B, NUM_FILTERS, H, W), jnp.float32)  # NCHW

    out = jax.jit(resnet_forward)(x, params)
    out = jax.block_until_ready(out)

    # layer0: [2,8,16,16] -> layer1 (stride 2): [2,8,8,8] -> AvgPool2d(2): [2,8,4,4]
    assert out.shape == (B, NUM_FILTERS, H // 4, W // 4), out.shape
    assert out.dtype == jnp.float32
    assert bool(jnp.all(jnp.isfinite(out)))

    ref = jax.jit(resnet_reference)(x, params)
    max_err = float(jnp.max(jnp.abs(out - ref)))
    assert bool(jnp.allclose(out, ref, rtol=3e-2, atol=3e-2)), (
        f"mismatch vs reference, max abs err = {max_err}")

    print("KERNEL_OK")
</pallas_src>

<mosaic_0001>
module attributes {stable_mosaic.version = 11 : i64} {
  func.func @_fused_resnet_kernel(%arg0: memref<8x512xf32, #tpu.memory_space<vmem>>, %arg1: memref<8x72xf32, #tpu.memory_space<vmem>>, %arg2: memref<8x1xf32, #tpu.memory_space<vmem>>, %arg3: memref<8x72xf32, #tpu.memory_space<vmem>>, %arg4: memref<8x1xf32, #tpu.memory_space<vmem>>, %arg5: memref<8x72xf32, #tpu.memory_space<vmem>>, %arg6: memref<8x1xf32, #tpu.memory_space<vmem>>, %arg7: memref<8x72xf32, #tpu.memory_space<vmem>>, %arg8: memref<8x1xf32, #tpu.memory_space<vmem>>, %arg9: memref<8x72xf32, #tpu.memory_space<vmem>>, %arg10: memref<8x1xf32, #tpu.memory_space<vmem>>, %arg11: memref<9x512xf32, #tpu.memory_space<vmem>>, %arg12: memref<9x128xf32, #tpu.memory_space<vmem>>, %arg13: memref<512x128xf32, #tpu.memory_space<vmem>>, %arg14: memref<128x32xf32, #tpu.memory_space<vmem>>, %arg15: memref<8x32xf32, #tpu.memory_space<vmem>>, %arg16: memref<8x768xf32, #tpu.memory_space<vmem>>) attributes {dimension_semantics = [], scalar_prefetch = 0 : i64, scratch_operands = 1 : i64, tpu.core_type = #tpu.core_type<tc>} {
    %c0 = arith.constant 0 : index
    %c0_0 = arith.constant 0 : index
    %0 = vector.load %arg0[%c0, %c0_0] : memref<8x512xf32, #tpu.memory_space<vmem>>, vector<8x512xf32>
    %cst = arith.constant 0.000000e+00 : f32
    %1 = vector.broadcast %cst : f32 to vector<8x768xf32>
    %c0_1 = arith.constant 0 : index
    %c0_2 = arith.constant 0 : index
    %2 = vector.load %arg16[%c0_1, %c0_2] : memref<8x768xf32, #tpu.memory_space<vmem>>, vector<8x768xf32>
    tpu.vector_store %arg16[%c0_1, %c0_2], %1 {strides = array<i32>} : memref<8x768xf32, #tpu.memory_space<vmem>>, vector<8x768xf32>,
    %c0_3 = arith.constant 0 : index
    %c128 = arith.constant 128 : index
    %3 = vector.load %arg16[%c0_3, %c128] : memref<8x768xf32, #tpu.memory_space<vmem>>, vector<8x512xf32>
    tpu.vector_store %arg16[%c0_3, %c128], %0 {strides = array<i32>} : memref<8x768xf32, #tpu.memory_space<vmem>>, vector<8x512xf32>,
    %c0_4 = arith.constant 0 : index
    %c111 = arith.constant 111 : index
    %4 = vector.load %arg16[%c0_4, %c111] : memref<8x768xf32, #tpu.memory_space<vmem>>, vector<8x512xf32>
    %c0_5 = arith.constant 0 : index
    %c0_6 = arith.constant 0 : index
    %5 = vector.load %arg11[%c0_5, %c0_6] : memref<9x512xf32, #tpu.memory_space<vmem>>, vector<1x512xf32>
    %6 = vector.broadcast %5 : vector<1x512xf32> to vector<8x512xf32>
    %7 = arith.mulf %4, %6 : vector<8x512xf32>
    %c0_7 = arith.constant 0 : index
    %c112 = arith.constant 112 : index
    %8 = vector.load %arg16[%c0_7, %c112] : memref<8x768xf32, #tpu.memory_space<vmem>>, vector<8x512xf32>
    %c1 = arith.constant 1 : index
    %c0_8 = arith.constant 0 : index
    %9 = vector.load %arg11[%c1, %c0_8] : memref<9x512xf32, #tpu.memory_space<vmem>>, vector<1x512xf32>
    %10 = vector.broadcast %9 : vector<1x512xf32> to vector<8x512xf32>
    %11 = arith.mulf %8, %10 : vector<8x512xf32>
    %c0_9 = arith.constant 0 : index
    %c113 = arith.constant 113 : index
    %12 = vector.load %arg16[%c0_9, %c113] : memref<8x768xf32, #tpu.memory_space<vmem>>, vector<8x512xf32>
    %c2 = arith.constant 2 : index
    %c0_10 = arith.constant 0 : index
    %13 = vector.load %arg11[%c2, %c0_10] : memref<9x512xf32, #tpu.memory_space<vmem>>, vector<1x512xf32>
    %14 = vector.broadcast %13 : vector<1x512xf32> to vector<8x512xf32>
    %15 = arith.mulf %12, %14 : vector<8x512xf32>
    %c0_11 = arith.constant 0 : index
    %c127 = arith.constant 127 : index
    %16 = vector.load %arg16[%c0_11, %c127] : memref<8x768xf32, #tpu.memory_space<vmem>>, vector<8x512xf32>
    %c3 = arith.constant 3 : index
    %c0_12 = arith.constant 0 : index
    %17 = vector.load %arg11[%c3, %c0_12] : memref<9x512xf32, #tpu.memory_space<vmem>>, vector<1x512xf32>
    %18 = vector.broadcast %17 : vector<1x512xf32> to vector<8x512xf32>
    %19 = arith.mulf %16, %18 : vector<8x512xf32>
    %c0_13 = arith.constant 0 : index
    %c128_14 = arith.constant 128 : index
    %20 = vector.load %arg16[%c0_13, %c128_14] : memref<8x768xf32, #tpu.memory_space<vmem>>, vector<8x512xf32>
    %c4 = arith.constant 4 : index
    %c0_15 = arith.constant 0 : index
    %21 = vector.load %arg11[%c4, %c0_15] : memref<9x512xf32, #tpu.memory_space<vmem>>, vector<1x512xf32>
    %22 = vector.broadcast %21 : vector<1x512xf32> to vector<8x512xf32>
    %23 = arith.mulf %20, %22 : vector<8x512xf32>
    %c0_16 = arith.constant 0 : index
    %c129 = arith.constant 129 : index
    %24 = vector.load %arg16[%c0_16, %c129] : memref<8x768xf32, #tpu.memory_space<vmem>>, vector<8x512xf32>
    %c5 = arith.constant 5 : index
    %c0_17 = arith.constant 0 : index
    %25 = vector.load %arg11[%c5, %c0_17] : memref<9x512xf32, #tpu.memory_space<vmem>>, vector<1x512xf32>
    %26 = vector.broadcast %25 : vector<1x512xf32> to vector<8x512xf32>
    %27 = arith.mulf %24, %26 : vector<8x512xf32>
    %c0_18 = arith.constant 0 : index
    %c143 = arith.constant 143 : index
    %28 = vector.load %arg16[%c0_18, %c143] : memref<8x768xf32, #tpu.memory_space<vmem>>, vector<8x512xf32>
    %c6 = arith.constant 6 : index
    %c0_19 = arith.constant 0 : index
    %29 = vector.load %arg11[%c6, %c0_19] : memref<9x512xf32, #tpu.memory_space<vmem>>, vector<1x512xf32>
    %30 = vector.broadcast %29 : vector<1x512xf32> to vector<8x512xf32>
    %31 = arith.mulf %28, %30 : vector<8x512xf32>
    %c0_20 = arith.constant 0 : index
    %c144 = arith.constant 144 : index
    %32 = vector.load %arg16[%c0_20, %c144] : memref<8x768xf32, #tpu.memory_space<vmem>>, vector<8x512xf32>
    %c7 = arith.constant 7 : index
    %c0_21 = arith.constant 0 : index
    %33 = vector.load %arg11[%c7, %c0_21] : memref<9x512xf32, #tpu.memory_space<vmem>>, vector<1x512xf32>
    %34 = vector.broadcast %33 : vector<1x512xf32> to vector<8x512xf32>
    %35 = arith.mulf %32, %34 : vector<8x512xf32>
    %c0_22 = arith.constant 0 : index
    %c145 = arith.constant 145 : index
    %36 = vector.load %arg16[%c0_22, %c145] : memref<8x768xf32, #tpu.memory_space<vmem>>, vector<8x512xf32>
    %c8 = arith.constant 8 : index
    %c0_23 = arith.constant 0 : index
    %37 = vector.load %arg11[%c8, %c0_23] : memref<9x512xf32, #tpu.memory_space<vmem>>, vector<1x512xf32>
    %38 = vector.broadcast %37 : vector<1x512xf32> to vector<8x512xf32>
    %39 = arith.mulf %36, %38 : vector<8x512xf32>
    %40 = tpu.concatenate %7, %11, %15, %19, %23, %27, %31, %35, %39 in 0 : vector<8x512xf32>, vector<8x512xf32>, vector<8x512xf32>, vector<8x512xf32>, vector<8x512xf32>, vector<8x512xf32>, vector<8x512xf32>, vector<8x512xf32>, vector<8x512xf32> -> vector<72x512xf32>
    %c0_24 = arith.constant 0 : index
    %c0_25 = arith.constant 0 : index
    %41 = vector.load %arg1[%c0_24, %c0_25] : memref<8x72xf32, #tpu.memory_space<vmem>>, vector<8x72xf32>
    %cst_26 = arith.constant dense<0.000000e+00> : vector<8x512xf32>
    %42 = tpu.matmul %41, %40, %cst_26 {dimension_numbers = #tpu.dot_dimension_numbers<[1], [0], [0], [1], [0, 0, 1, 1], [], []>} : vector<8x72xf32>, vector<72x512xf32>, vector<8x512xf32> -> vector<8x512xf32>
    %c0_27 = arith.constant 0 : index
    %c0_28 = arith.constant 0 : index
    %43 = vector.load %arg2[%c0_27, %c0_28] : memref<8x1xf32, #tpu.memory_space<vmem>>, vector<8x1xf32>
    %44 = vector.broadcast %43 : vector<8x1xf32> to vector<8x512xf32>
    %45 = arith.addf %42, %44 : vector<8x512xf32>
    %cst_29 = arith.constant 0.000000e+00 : f32
    %46 = vector.broadcast %cst_29 : f32 to vector<8x512xf32>
    %47 = arith.maximumf %45, %46 : vector<8x512xf32>
    %cst_30 = arith.constant 0.000000e+00 : f32
    %48 = vector.broadcast %cst_30 : f32 to vector<8x768xf32>
    %c0_31 = arith.constant 0 : index
    %c0_32 = arith.constant 0 : index
    %49 = vector.load %arg16[%c0_31, %c0_32] : memref<8x768xf32, #tpu.memory_space<vmem>>, vector<8x768xf32>
    tpu.vector_store %arg16[%c0_31, %c0_32], %48 {strides = array<i32>} : memref<8x768xf32, #tpu.memory_space<vmem>>, vector<8x768xf32>,
    %c0_33 = arith.constant 0 : index
    %c128_34 = arith.constant 128 : index
    %50 = vector.load %arg16[%c0_33, %c128_34] : memref<8x768xf32, #tpu.memory_space<vmem>>, vector<8x512xf32>
    tpu.vector_store %arg16[%c0_33, %c128_34], %47 {strides = array<i32>} : memref<8x768xf32, #tpu.memory_space<vmem>>, vector<8x512xf32>,
    %c0_35 = arith.constant 0 : index
    %c111_36 = arith.constant 111 : index
    %51 = vector.load %arg16[%c0_35, %c111_36] : memref<8x768xf32, #tpu.memory_space<vmem>>, vector<8x512xf32>
    %c0_37 = arith.constant 0 : index
    %c0_38 = arith.constant 0 : index
    %52 = vector.load %arg11[%c0_37, %c0_38] : memref<9x512xf32, #tpu.memory_space<vmem>>, vector<1x512xf32>
    %53 = vector.broadcast %52 : vector<1x512xf32> to vector<8x512xf32>
    %54 = arith.mulf %51, %53 : vector<8x512xf32>
    %c0_39 = arith.constant 0 : index
    %c112_40 = arith.constant 112 : index
    %55 = vector.load %arg16[%c0_39, %c112_40] : memref<8x768xf32, #tpu.memory_space<vmem>>, vector<8x512xf32>
    %c1_41 = arith.constant 1 : index
    %c0_42 = arith.constant 0 : index
    %56 = vector.load %arg11[%c1_41, %c0_42] : memref<9x512xf32, #tpu.memory_space<vmem>>, vector<1x512xf32>
    %57 = vector.broadcast %56 : vector<1x512xf32> to vector<8x512xf32>
    %58 = arith.mulf %55, %57 : vector<8x512xf32>
    %c0_43 = arith.constant 0 : index
    %c113_44 = arith.constant 113 : index
    %59 = vector.load %arg16[%c0_43, %c113_44] : memref<8x768xf32, #tpu.memory_space<vmem>>, vector<8x512xf32>
    %c2_45 = arith.constant 2 : index
    %c0_46 = arith.constant 0 : index
    %60 = vector.load %arg11[%c2_45, %c0_46] : memref<9x512xf32, #tpu.memory_space<vmem>>, vector<1x512xf32>
    %61 = vector.broadcast %60 : vector<1x512xf32> to vector<8x512xf32>
    %62 = arith.mulf %59, %61 : vector<8x512xf32>
    %c0_47 = arith.constant 0 : index
    %c127_48 = arith.constant 127 : index
    %63 = vector.load %arg16[%c0_47, %c127_48] : memref<8x768xf32, #tpu.memory_space<vmem>>, vector<8x512xf32>
    %c3_49 = arith.constant 3 : index
    %c0_50 = arith.constant 0 : index
    %64 = vector.load %arg11[%c3_49, %c0_50] : memref<9x512xf32, #tpu.memory_space<vmem>>, vector<1x512xf32>
    %65 = vector.broadcast %64 : vector<1x512xf32> to vector<8x512xf32>
    %66 = arith.mulf %63, %65 : vector<8x512xf32>
    %c0_51 = arith.constant 0 : index
    %c128_52 = arith.constant 128 : index
    %67 = vector.load %arg16[%c0_51, %c128_52] : memref<8x768xf32, #tpu.memory_space<vmem>>, vector<8x512xf32>
    %c4_53 = arith.constant 4 : index
    %c0_54 = arith.constant 0 : index
    %68 = vector.load %arg11[%c4_53, %c0_54] : memref<9x512xf32, #tpu.memory_space<vmem>>, vector<1x512xf32>
    %69 = vector.broadcast %68 : vector<1x512xf32> to vector<8x512xf32>
    %70 = arith.mulf %67, %69 : vector<8x512xf32>
    %c0_55 = arith.constant 0 : index
    %c129_56 = arith.constant 129 : index
    %71 = vector.load %arg16[%c0_55, %c129_56] : memref<8x768xf32, #tpu.memory_space<vmem>>, vector<8x512xf32>
    %c5_57 = arith.constant 5 : index
    %c0_58 = arith.constant 0 : index
    %72 = vector.load %arg11[%c5_57, %c0_58] : memref<9x512xf32, #tpu.memory_space<vmem>>, vector<1x512xf32>
    %73 = vector.broadcast %72 : vector<1x512xf32> to vector<8x512xf32>
    %74 = arith.mulf %71, %73 : vector<8x512xf32>
    %c0_59 = arith.constant 0 : index
    %c143_60 = arith.constant 143 : index
    %75 = vector.load %arg16[%c0_59, %c143_60] : memref<8x768xf32, #tpu.memory_space<vmem>>, vector<8x512xf32>
    %c6_61 = arith.constant 6 : index
    %c0_62 = arith.constant 0 : index
    %76 = vector.load %arg11[%c6_61, %c0_62] : memref<9x512xf32, #tpu.memory_space<vmem>>, vector<1x512xf32>
    %77 = vector.broadcast %76 : vector<1x512xf32> to vector<8x512xf32>
    %78 = arith.mulf %75, %77 : vector<8x512xf32>
    %c0_63 = arith.constant 0 : index
    %c144_64 = arith.constant 144 : index
    %79 = vector.load %arg16[%c0_63, %c144_64] : memref<8x768xf32, #tpu.memory_space<vmem>>, vector<8x512xf32>
    %c7_65 = arith.constant 7 : index
    %c0_66 = arith.constant 0 : index
    %80 = vector.load %arg11[%c7_65, %c0_66] : memref<9x512xf32, #tpu.memory_space<vmem>>, vector<1x512xf32>
    %81 = vector.broadcast %80 : vector<1x512xf32> to vector<8x512xf32>
    %82 = arith.mulf %79, %81 : vector<8x512xf32>
    %c0_67 = arith.constant 0 : index
    %c145_68 = arith.constant 145 : index
    %83 = vector.load %arg16[%c0_67, %c145_68] : memref<8x768xf32, #tpu.memory_space<vmem>>, vector<8x512xf32>
    %c8_69 = arith.constant 8 : index
    %c0_70 = arith.constant 0 : index
    %84 = vector.load %arg11[%c8_69, %c0_70] : memref<9x512xf32, #tpu.memory_space<vmem>>, vector<1x512xf32>
    %85 = vector.broadcast %84 : vector<1x512xf32> to vector<8x512xf32>
    %86 = arith.mulf %83, %85 : vector<8x512xf32>
    %87 = tpu.concatenate %54, %58, %62, %66, %70, %74, %78, %82, %86 in 0 : vector<8x512xf32>, vector<8x512xf32>, vector<8x512xf32>, vector<8x512xf32>, vector<8x512xf32>, vector<8x512xf32>, vector<8x512xf32>, vector<8x512xf32>, vector<8x512xf32> -> vector<72x512xf32>
    %c0_71 = arith.constant 0 : index
    %c0_72 = arith.constant 0 : index
    %88 = vector.load %arg3[%c0_71, %c0_72] : memref<8x72xf32, #tpu.memory_space<vmem>>, vector<8x72xf32>
    %cst_73 = arith.constant dense<0.000000e+00> : vector<8x512xf32>
    %89 = tpu.matmul %88, %87, %cst_73 {dimension_numbers = #tpu.dot_dimension_numbers<[1], [0], [0], [1], [0, 0, 1, 1], [], []>} : vector<8x72xf32>, vector<72x512xf32>, vector<8x512xf32> -> vector<8x512xf32>
    %c0_74 = arith.constant 0 : index
    %c0_75 = arith.constant 0 : index
    %90 = vector.load %arg4[%c0_74, %c0_75] : memref<8x1xf32, #tpu.memory_space<vmem>>, vector<8x1xf32>
    %91 = vector.broadcast %90 : vector<8x1xf32> to vector<8x512xf32>
    %92 = arith.addf %89, %91 : vector<8x512xf32>
    %93 = arith.addf %92, %0 : vector<8x512xf32>
    %cst_76 = arith.constant 0.000000e+00 : f32
    %94 = vector.broadcast %cst_76 : f32 to vector<8x512xf32>
    %95 = arith.maximumf %93, %94 : vector<8x512xf32>
    %c0_77 = arith.constant 0 : index
    %c0_78 = arith.constant 0 : index
    %96 = vector.load %arg13[%c0_77, %c0_78] : memref<512x128xf32, #tpu.memory_space<vmem>>, vector<512x128xf32>
    %cst_79 = arith.constant 0.000000e+00 : f32
    %97 = vector.broadcast %cst_79 : f32 to vector<8x768xf32>
    %c0_80 = arith.constant 0 : index
    %c0_81 = arith.constant 0 : index
    %98 = vector.load %arg16[%c0_80, %c0_81] : memref<8x768xf32, #tpu.memory_space<vmem>>, vector<8x768xf32>
    tpu.vector_store %arg16[%c0_80, %c0_81], %97 {strides = array<i32>} : memref<8x768xf32, #tpu.memory_space<vmem>>, vector<8x768xf32>,
    %c0_82 = arith.constant 0 : index
    %c128_83 = arith.constant 128 : index
    %99 = vector.load %arg16[%c0_82, %c128_83] : memref<8x768xf32, #tpu.memory_space<vmem>>, vector<8x512xf32>
    tpu.vector_store %arg16[%c0_82, %c128_83], %95 {strides = array<i32>} : memref<8x768xf32, #tpu.memory_space<vmem>>, vector<8x512xf32>,
    %c0_84 = arith.constant 0 : index
    %c111_85 = arith.constant 111 : index
    %100 = vector.load %arg16[%c0_84, %c111_85] : memref<8x768xf32, #tpu.memory_space<vmem>>, vector<8x512xf32>
    %c0_86 = arith.constant 0 : index
    %c0_87 = arith.constant 0 : index
    %101 = vector.load %arg11[%c0_86, %c0_87] : memref<9x512xf32, #tpu.memory_space<vmem>>, vector<1x512xf32>
    %102 = vector.broadcast %101 : vector<1x512xf32> to vector<8x512xf32>
    %103 = arith.mulf %100, %102 : vector<8x512xf32>
    %c0_88 = arith.constant 0 : index
    %c112_89 = arith.constant 112 : index
    %104 = vector.load %arg16[%c0_88, %c112_89] : memref<8x768xf32, #tpu.memory_space<vmem>>, vector<8x512xf32>
    %c1_90 = arith.constant 1 : index
    %c0_91 = arith.constant 0 : index
    %105 = vector.load %arg11[%c1_90, %c0_91] : memref<9x512xf32, #tpu.memory_space<vmem>>, vector<1x512xf32>
    %106 = vector.broadcast %105 : vector<1x512xf32> to vector<8x512xf32>
    %107 = arith.mulf %104, %106 : vector<8x512xf32>
    %c0_92 = arith.constant 0 : index
    %c113_93 = arith.constant 113 : index
    %108 = vector.load %arg16[%c0_92, %c113_93] : memref<8x768xf32, #tpu.memory_space<vmem>>, vector<8x512xf32>
    %c2_94 = arith.constant 2 : index
    %c0_95 = arith.constant 0 : index
    %109 = vector.load %arg11[%c2_94, %c0_95] : memref<9x512xf32, #tpu.memory_space<vmem>>, vector<1x512xf32>
    %110 = vector.broadcast %109 : vector<1x512xf32> to vector<8x512xf32>
    %111 = arith.mulf %108, %110 : vector<8x512xf32>
    %c0_96 = arith.constant 0 : index
    %c127_97 = arith.constant 127 : index
    %112 = vector.load %arg16[%c0_96, %c127_97] : memref<8x768xf32, #tpu.memory_space<vmem>>, vector<8x512xf32>
    %c3_98 = arith.constant 3 : index
    %c0_99 = arith.constant 0 : index
    %113 = vector.load %arg11[%c3_98, %c0_99] : memref<9x512xf32, #tpu.memory_space<vmem>>, vector<1x512xf32>
    %114 = vector.broadcast %113 : vector<1x512xf32> to vector<8x512xf32>
    %115 = arith.mulf %112, %114 : vector<8x512xf32>
    %c0_100 = arith.constant 0 : index
    %c128_101 = arith.constant 128 : index
    %116 = vector.load %arg16[%c0_100, %c128_101] : memref<8x768xf32, #tpu.memory_space<vmem>>, vector<8x512xf32>
    %c4_102 = arith.constant 4 : index
    %c0_103 = arith.constant 0 : index
    %117 = vector.load %arg11[%c4_102, %c0_103] : memref<9x512xf32, #tpu.memory_space<vmem>>, vector<1x512xf32>
    %118 = vector.broadcast %117 : vector<1x512xf32> to vector<8x512xf32>
    %119 = arith.mulf %116, %118 : vector<8x512xf32>
    %c0_104 = arith.constant 0 : index
    %c129_105 = arith.constant 129 : index
    %120 = vector.load %arg16[%c0_104, %c129_105] : memref<8x768xf32, #tpu.memory_space<vmem>>, vector<8x512xf32>
    %c5_106 = arith.constant 5 : index
    %c0_107 = arith.constant 0 : index
    %121 = vector.load %arg11[%c5_106, %c0_107] : memref<9x512xf32, #tpu.memory_space<vmem>>, vector<1x512xf32>
    %122 = vector.broadcast %121 : vector<1x512xf32> to vector<8x512xf32>
    %123 = arith.mulf %120, %122 : vector<8x512xf32>
    %c0_108 = arith.constant 0 : index
    %c143_109 = arith.constant 143 : index
    %124 = vector.load %arg16[%c0_108, %c143_109] : memref<8x768xf32, #tpu.memory_space<vmem>>, vector<8x512xf32>
    %c6_110 = arith.constant 6 : index
    %c0_111 = arith.constant 0 : index
    %125 = vector.load %arg11[%c6_110, %c0_111] : memref<9x512xf32, #tpu.memory_space<vmem>>, vector<1x512xf32>
    %126 = vector.broadcast %125 : vector<1x512xf32> to vector<8x512xf32>
    %127 = arith.mulf %124, %126 : vector<8x512xf32>
    %c0_112 = arith.constant 0 : index
    %c144_113 = arith.constant 144 : index
    %128 = vector.load %arg16[%c0_112, %c144_113] : memref<8x768xf32, #tpu.memory_space<vmem>>, vector<8x512xf32>
    %c7_114 = arith.constant 7 : index
    %c0_115 = arith.constant 0 : index
    %129 = vector.load %arg11[%c7_114, %c0_115] : memref<9x512xf32, #tpu.memory_space<vmem>>, vector<1x512xf32>
    %130 = vector.broadcast %129 : vector<1x512xf32> to vector<8x512xf32>
    %131 = arith.mulf %128, %130 : vector<8x512xf32>
    %c0_116 = arith.constant 0 : index
    %c145_117 = arith.constant 145 : index
    %132 = vector.load %arg16[%c0_116, %c145_117] : memref<8x768xf32, #tpu.memory_space<vmem>>, vector<8x512xf32>
    %c8_118 = arith.constant 8 : index
    %c0_119 = arith.constant 0 : index
    %133 = vector.load %arg11[%c8_118, %c0_119] : memref<9x512xf32, #tpu.memory_space<vmem>>, vector<1x512xf32>
    %134 = vector.broadcast %133 : vector<1x512xf32> to vector<8x512xf32>
    %135 = arith.mulf %132, %134 : vector<8x512xf32>
    %136 = tpu.concatenate %103, %107, %111, %115, %119, %123, %127, %131, %135 in 0 : vector<8x512xf32>, vector<8x512xf32>, vector<8x512xf32>, vector<8x512xf32>, vector<8x512xf32>, vector<8x512xf32>, vector<8x512xf32>, vector<8x512xf32>, vector<8x512xf32> -> vector<72x512xf32>
    %c0_120 = arith.constant 0 : index
    %c0_121 = arith.constant 0 : index
    %137 = vector.load %arg5[%c0_120, %c0_121] : memref<8x72xf32, #tpu.memory_space<vmem>>, vector<8x72xf32>
    %cst_122 = arith.constant dense<0.000000e+00> : vector<8x512xf32>
    %138 = tpu.matmul %137, %136, %cst_122 {dimension_numbers = #tpu.dot_dimension_numbers<[1], [0], [0], [1], [0, 0, 1, 1], [], []>} : vector<8x72xf32>, vector<72x512xf32>, vector<8x512xf32> -> vector<8x512xf32>
    %c0_123 = arith.constant 0 : index
    %c0_124 = arith.constant 0 : index
    %139 = vector.load %arg6[%c0_123, %c0_124] : memref<8x1xf32, #tpu.memory_space<vmem>>, vector<8x1xf32>
    %140 = vector.broadcast %139 : vector<8x1xf32> to vector<8x512xf32>
    %141 = arith.addf %138, %140 : vector<8x512xf32>
    %cst_125 = arith.constant 0.000000e+00 : f32
    %142 = vector.broadcast %cst_125 : f32 to vector<8x512xf32>
    %143 = arith.maximumf %141, %142 : vector<8x512xf32>
    %cst_126 = arith.constant dense<0.000000e+00> : vector<8x128xf32>
    %144 = tpu.matmul %143, %96, %cst_126 {dimension_numbers = #tpu.dot_dimension_numbers<[1], [0], [0], [1], [0, 0, 1, 1], [], []>} : vector<8x512xf32>, vector<512x128xf32>, vector<8x128xf32> -> vector<8x128xf32>
    %c0_127 = arith.constant 0 : index
    %c0_128 = arith.constant 0 : index
    %145 = vector.load %arg9[%c0_127, %c0_128] : memref<8x72xf32, #tpu.memory_space<vmem>>, vector<8x72xf32>
    %cst_129 = arith.constant dense<0.000000e+00> : vector<8x512xf32>
    %146 = tpu.matmul %145, %136, %cst_129 {dimension_numbers = #tpu.dot_dimension_numbers<[1], [0], [0], [1], [0, 0, 1, 1], [], []>} : vector<8x72xf32>, vector<72x512xf32>, vector<8x512xf32> -> vector<8x512xf32>
    %c0_130 = arith.constant 0 : index
    %c0_131 = arith.constant 0 : index
    %147 = vector.load %arg10[%c0_130, %c0_131] : memref<8x1xf32, #tpu.memory_space<vmem>>, vector<8x1xf32>
    %148 = vector.broadcast %147 : vector<8x1xf32> to vector<8x512xf32>
    %149 = arith.addf %146, %148 : vector<8x512xf32>
    %cst_132 = arith.constant dense<0.000000e+00> : vector<8x128xf32>
    %150 = tpu.matmul %149, %96, %cst_132 {dimension_numbers = #tpu.dot_dimension_numbers<[1], [0], [0], [1], [0, 0, 1, 1], [], []>} : vector<8x512xf32>, vector<512x128xf32>, vector<8x128xf32> -> vector<8x128xf32>
    %cst_133 = arith.constant 0.000000e+00 : f32
    %151 = vector.broadcast %cst_133 : f32 to vector<8x768xf32>
    %c0_134 = arith.constant 0 : index
    %c0_135 = arith.constant 0 : index
    %152 = vector.load %arg16[%c0_134, %c0_135] : memref<8x768xf32, #tpu.memory_space<vmem>>, vector<8x768xf32>
    tpu.vector_store %arg16[%c0_134, %c0_135], %151 {strides = array<i32>} : memref<8x768xf32, #tpu.memory_space<vmem>>, vector<8x768xf32>,
    %c0_136 = arith.constant 0 : index
    %c128_137 = arith.constant 128 : index
    %153 = vector.load %arg16[%c0_136, %c128_137] : memref<8x768xf32, #tpu.memory_space<vmem>>, vector<8x128xf32>
    tpu.vector_store %arg16[%c0_136, %c128_137], %144 {strides = array<i32>} : memref<8x768xf32, #tpu.memory_space<vmem>>, vector<8x128xf32>,
    %c0_138 = arith.constant 0 : index
    %c119 = arith.constant 119 : index
    %154 = vector.load %arg16[%c0_138, %c119] : memref<8x768xf32, #tpu.memory_space<vmem>>, vector<8x128xf32>
    %c0_139 = arith.constant 0 : index
    %c0_140 = arith.constant 0 : index
    %155 = vector.load %arg12[%c0_139, %c0_140] : memref<9x128xf32, #tpu.memory_space<vmem>>, vector<1x128xf32>
    %156 = vector.broadcast %155 : vector<1x128xf32> to vector<8x128xf32>
    %157 = arith.mulf %154, %156 : vector<8x128xf32>
    %c0_141 = arith.constant 0 : index
    %c120 = arith.constant 120 : index
    %158 = vector.load %arg16[%c0_141, %c120] : memref<8x768xf32, #tpu.memory_space<vmem>>, vector<8x128xf32>
    %c1_142 = arith.constant 1 : index
    %c0_143 = arith.constant 0 : index
    %159 = vector.load %arg12[%c1_142, %c0_143] : memref<9x128xf32, #tpu.memory_space<vmem>>, vector<1x128xf32>
    %160 = vector.broadcast %159 : vector<1x128xf32> to vector<8x128xf32>
    %161 = arith.mulf %158, %160 : vector<8x128xf32>
    %c0_144 = arith.constant 0 : index
    %c121 = arith.constant 121 : index
    %162 = vector.load %arg16[%c0_144, %c121] : memref<8x768xf32, #tpu.memory_space<vmem>>, vector<8x128xf32>
    %c2_145 = arith.constant 2 : index
    %c0_146 = arith.constant 0 : index
    %163 = vector.load %arg12[%c2_145, %c0_146] : memref<9x128xf32, #tpu.memory_space<vmem>>, vector<1x128xf32>
    %164 = vector.broadcast %163 : vector<1x128xf32> to vector<8x128xf32>
    %165 = arith.mulf %162, %164 : vector<8x128xf32>
    %c0_147 = arith.constant 0 : index
    %c127_148 = arith.constant 127 : index
    %166 = vector.load %arg16[%c0_147, %c127_148] : memref<8x768xf32, #tpu.memory_space<vmem>>, vector<8x128xf32>
    %c3_149 = arith.constant 3 : index
    %c0_150 = arith.constant 0 : index
    %167 = vector.load %arg12[%c3_149, %c0_150] : memref<9x128xf32, #tpu.memory_space<vmem>>, vector<1x128xf32>
    %168 = vector.broadcast %167 : vector<1x128xf32> to vector<8x128xf32>
    %169 = arith.mulf %166, %168 : vector<8x128xf32>
    %c0_151 = arith.constant 0 : index
    %c128_152 = arith.constant 128 : index
    %170 = vector.load %arg16[%c0_151, %c128_152] : memref<8x768xf32, #tpu.memory_space<vmem>>, vector<8x128xf32>
    %c4_153 = arith.constant 4 : index
    %c0_154 = arith.constant 0 : index
    %171 = vector.load %arg12[%c4_153, %c0_154] : memref<9x128xf32, #tpu.memory_space<vmem>>, vector<1x128xf32>
    %172 = vector.broadcast %171 : vector<1x128xf32> to vector<8x128xf32>
    %173 = arith.mulf %170, %172 : vector<8x128xf32>
    %c0_155 = arith.constant 0 : index
    %c129_156 = arith.constant 129 : index
    %174 = vector.load %arg16[%c0_155, %c129_156] : memref<8x768xf32, #tpu.memory_space<vmem>>, vector<8x128xf32>
    %c5_157 = arith.constant 5 : index
    %c0_158 = arith.constant 0 : index
    %175 = vector.load %arg12[%c5_157, %c0_158] : memref<9x128xf32, #tpu.memory_space<vmem>>, vector<1x128xf32>
    %176 = vector.broadcast %175 : vector<1x128xf32> to vector<8x128xf32>
    %177 = arith.mulf %174, %176 : vector<8x128xf32>
    %c0_159 = arith.constant 0 : index
    %c135 = arith.constant 135 : index
    %178 = vector.load %arg16[%c0_159, %c135] : memref<8x768xf32, #tpu.memory_space<vmem>>, vector<8x128xf32>
    %c6_160 = arith.constant 6 : index
    %c0_161 = arith.constant 0 : index
    %179 = vector.load %arg12[%c6_160, %c0_161] : memref<9x128xf32, #tpu.memory_space<vmem>>, vector<1x128xf32>
    %180 = vector.broadcast %179 : vector<1x128xf32> to vector<8x128xf32>
    %181 = arith.mulf %178, %180 : vector<8x128xf32>
    %c0_162 = arith.constant 0 : index
    %c136 = arith.constant 136 : index
    %182 = vector.load %arg16[%c0_162, %c136] : memref<8x768xf32, #tpu.memory_space<vmem>>, vector<8x128xf32>
    %c7_163 = arith.constant 7 : index
    %c0_164 = arith.constant 0 : index
    %183 = vector.load %arg12[%c7_163, %c0_164] : memref<9x128xf32, #tpu.memory_space<vmem>>, vector<1x128xf32>
    %184 = vector.broadcast %183 : vector<1x128xf32> to vector<8x128xf32>
    %185 = arith.mulf %182, %184 : vector<8x128xf32>
    %c0_165 = arith.constant 0 : index
    %c137 = arith.constant 137 : index
    %186 = vector.load %arg16[%c0_165, %c137] : memref<8x768xf32, #tpu.memory_space<vmem>>, vector<8x128xf32>
    %c8_166 = arith.constant 8 : index
    %c0_167 = arith.constant 0 : index
    %187 = vector.load %arg12[%c8_166, %c0_167] : memref<9x128xf32, #tpu.memory_space<vmem>>, vector<1x128xf32>
    %188 = vector.broadcast %187 : vector<1x128xf32> to vector<8x128xf32>
    %189 = arith.mulf %186, %188 : vector<8x128xf32>
    %190 = tpu.concatenate %157, %161, %165, %169, %173, %177, %181, %185, %189 in 0 : vector<8x128xf32>, vector<8x128xf32>, vector<8x128xf32>, vector<8x128xf32>, vector<8x128xf32>, vector<8x128xf32>, vector<8x128xf32>, vector<8x128xf32>, vector<8x128xf32> -> vector<72x128xf32>
    %c0_168 = arith.constant 0 : index
    %c0_169 = arith.constant 0 : index
    %191 = vector.load %arg7[%c0_168, %c0_169] : memref<8x72xf32, #tpu.memory_space<vmem>>, vector<8x72xf32>
    %cst_170 = arith.constant dense<0.000000e+00> : vector<8x128xf32>
    %192 = tpu.matmul %191, %190, %cst_170 {dimension_numbers = #tpu.dot_dimension_numbers<[1], [0], [0], [1], [0, 0, 1, 1], [], []>} : vector<8x72xf32>, vector<72x128xf32>, vector<8x128xf32> -> vector<8x128xf32>
    %c0_171 = arith.constant 0 : index
    %c0_172 = arith.constant 0 : index
    %193 = vector.load %arg8[%c0_171, %c0_172] : memref<8x1xf32, #tpu.memory_space<vmem>>, vector<8x1xf32>
    %194 = vector.broadcast %193 : vector<8x1xf32> to vector<8x128xf32>
    %195 = arith.addf %192, %194 : vector<8x128xf32>
    %196 = arith.addf %195, %150 : vector<8x128xf32>
    %cst_173 = arith.constant 0.000000e+00 : f32
    %197 = vector.broadcast %cst_173 : f32 to vector<8x128xf32>
    %198 = arith.maximumf %196, %197 : vector<8x128xf32>
    %c0_174 = arith.constant 0 : index
    %c0_175 = arith.constant 0 : index
    %199 = vector.load %arg14[%c0_174, %c0_175] : memref<128x32xf32, #tpu.memory_space<vmem>>, vector<128x32xf32>
    %cst_176 = arith.constant dense<0.000000e+00> : vector<8x32xf32>
    %200 = tpu.matmul %198, %199, %cst_176 {dimension_numbers = #tpu.dot_dimension_numbers<[1], [0], [0], [1], [0, 0, 1, 1], [], []>} : vector<8x128xf32>, vector<128x32xf32>, vector<8x32xf32> -> vector<8x32xf32>
    %c0_177 = arith.constant 0 : index
    %c0_178 = arith.constant 0 : index
    %201 = vector.load %arg15[%c0_177, %c0_178] : memref<8x32xf32, #tpu.memory_space<vmem>>, vector<8x32xf32>
    tpu.vector_store %arg15[%c0_177, %c0_178], %200 {strides = array<i32>} : memref<8x32xf32, #tpu.memory_space<vmem>>, vector<8x32xf32>,
    return
  }
}

</mosaic_0001>

<llo_original>
// kernel: tile.128
$region0: #{tile.128}
  #allocation0 [shape = 's32[1]{0}', space=sflag, size = 0x4, scoped, tag = 'scoped memory for tile.128']
  %s0 = inlined_call_operand.vmem [shape: f32[64], index: 0, kind: input, shape index: {}]
  %s1 = inlined_call_operand.vmem [shape: f32[2,64], index: 1, kind: output, shape index: {}]
  // Predicated region
  $region2: #{tile.128} parent=0 // pred_check
    _
  $region3: #{tile.128} parent=0 // pred_check_branch
    %3 = sbr.rel (0) target = $region5
  $region4: #{tile.128} parent=0 // pred_region
    _
  $region5: #{tile.128} parent=0 // pred_fallthru
    _
  %v4 = vld [vmem:[%s0] ss:$0 sm:$0xff]
  %5 = vst [vmem:[%s1] sm:$0x3] %v4

// kernel: tile.141
$region0: #{tile.141}
  %s0 = inlined_call_operand.vmem [shape: f32[2,64], index: 0, kind: input, shape index: {}]
  %s1 = inlined_call_operand.vmem [shape: f32[1,128], index: 1, kind: output, shape index: {}]
  $region1: #{tile.141} parent=0
    #allocation0 [shape = 'u8[4096]{0}', space=vmem, size = 0x1000, scoped, tag = 'scoped mem for output reshape']
    #allocation1 [shape = 'u8[4096]{0}', space=vmem, size = 0x1000, scoped, tag = 'scoped mem for input reshape']
    %s3 = ssub.s32 4, 1
    %v4 = vld [vmem:[%s0] sm:%s3]
    %5 = vst [vmem:[#allocation1] sm:%s3] %v4
    %v6 = vld [vmem:[#allocation1] sm:$0x1]
    %vm7 = vcmask 523264
    %8 = vst.msk [vmem:[#allocation0] sm:$0x1] %vm7, %v6
    %s9 = scalar_lea.vmem [#allocation1], 1
    %v10 = vld [vmem:[%s9] sm:$0x1]
    %11 = vrot.lane.b32.xlu0 %v10, 64
    %v12 = vpop.permute.xlu0 %11
    %vm13 = vcmask 1048064
    %14 = vst.msk [vmem:[#allocation0] sm:$0x1] %vm13, %v12
    %s16 = ssub.s32 2, 1
    %v17 = vld [vmem:[#allocation0] sm:%s16]
    %s19 = ssub.s32 2, 1
    %20 = vst [vmem:[%s1] sm:%s19] %v17

// kernel: resnet_forward.1
$region0: #{resnet_forward.1}
  #allocation0 [shape = 'u32[]', space=smem, size = 0x4, offset = 0x4, fixed_abs, tag = 'smem constant byte address 0x4 - core index']
  #allocation1 [shape = 'u32[72,128]{1,0:T(1,128)}', space=vmem, size = 0x9000, scoped, tag = 'internal scratch']
  #allocation2 [shape = 'f32[8,768]{1,0:T(8,128)}', space=vmem, size = 0x6000, scoped, tag = 'scratch operand']
  %s0 = inlined_call_operand.vmem [shape: f32[8,512], index: 0, kind: input, shape index: {}]
  %s1 = inlined_call_operand.vmem [shape: f32[8,72], index: 1, kind: input, shape index: {}]
  %s2 = inlined_call_operand.vmem [shape: f32[8,1], index: 2, kind: input, shape index: {}]
  %s3 = inlined_call_operand.vmem [shape: f32[8,72], index: 3, kind: input, shape index: {}]
  %s4 = inlined_call_operand.vmem [shape: f32[8,1], index: 4, kind: input, shape index: {}]
  %s5 = inlined_call_operand.vmem [shape: f32[8,72], index: 5, kind: input, shape index: {}]
  %s6 = inlined_call_operand.vmem [shape: f32[8,1], index: 6, kind: input, shape index: {}]
  %s7 = inlined_call_operand.vmem [shape: f32[8,72], index: 7, kind: input, shape index: {}]
  %s8 = inlined_call_operand.vmem [shape: f32[8,1], index: 8, kind: input, shape index: {}]
  %s9 = inlined_call_operand.vmem [shape: f32[8,72], index: 9, kind: input, shape index: {}]
  %s10 = inlined_call_operand.vmem [shape: f32[8,1], index: 10, kind: input, shape index: {}]
  %s11 = inlined_call_operand.vmem [shape: f32[9,512], index: 11, kind: input, shape index: {}]
  %s12 = inlined_call_operand.vmem [shape: f32[9,128], index: 12, kind: input, shape index: {}]
  %s13 = inlined_call_operand.vmem [shape: f32[512,128], index: 13, kind: input, shape index: {}]
  %s14 = inlined_call_operand.vmem [shape: f32[128,32], index: 14, kind: input, shape index: {}]
  %s15 = inlined_call_operand.vmem [shape: f32[8,32], index: 15, kind: output, shape index: {}]
  %s16 = sld [smem:[#allocation0]]
  $region70: #{resnet_forward.1} parent=0
    _
  %s18 = ssub.s32 1, %s16
  %s19 = scalar_select 0, %s18, %s16
  // Predicated region
  $region2: #{resnet_forward.1} parent=0 // pred_check
    _
  $region3: #{resnet_forward.1} parent=0 // pred_check_branch
    %21 = sbr.rel (0) target = $region5
  $region4: #{resnet_forward.1} parent=0 // pred_region
    _
  $region5: #{resnet_forward.1} parent=0 // pred_fallthru
    _
  // Predicated region
  $region6: #{resnet_forward.1} parent=0 // pred_check
    _
  $region7: #{resnet_forward.1} parent=0 // pred_check_branch
    %23 = sbr.rel (0) target = $region9
  $region8: #{resnet_forward.1} parent=0 // pred_region
    _
  $region9: #{resnet_forward.1} parent=0 // pred_fallthru
    _
  // Predicated region
  $region10: #{resnet_forward.1} parent=0 // pred_check
    _
  $region11: #{resnet_forward.1} parent=0 // pred_check_branch
    %25 = sbr.rel (0) target = $region13
  $region12: #{resnet_forward.1} parent=0 // pred_region
    _
  $region13: #{resnet_forward.1} parent=0 // pred_fallthru
    _
  // Predicated region
  $region14: #{resnet_forward.1} parent=0 // pred_check
    _
  $region15: #{resnet_forward.1} parent=0 // pred_check_branch
    %27 = sbr.rel (0) target = $region17
  $region16: #{resnet_forward.1} parent=0 // pred_region
    _
  $region17: #{resnet_forward.1} parent=0 // pred_fallthru
    _
  // Predicated region
  $region18: #{resnet_forward.1} parent=0 // pred_check
    _
  $region19: #{resnet_forward.1} parent=0 // pred_check_branch
    %29 = sbr.rel (0) target = $region21
  $region20: #{resnet_forward.1} parent=0 // pred_region
    _
  $region21: #{resnet_forward.1} parent=0 // pred_fallthru
    _
  // Predicated region
  $region22: #{resnet_forward.1} parent=0 // pred_check
    _
  $region23: #{resnet_forward.1} parent=0 // pred_check_branch
    %31 = sbr.rel (0) target = $region25
  $region24: #{resnet_forward.1} parent=0 // pred_region
    _
  $region25: #{resnet_forward.1} parent=0 // pred_fallthru
    _
  // Predicated region
  $region26: #{resnet_forward.1} parent=0 // pred_check
    _
  $region27: #{resnet_forward.1} parent=0 // pred_check_branch
    %33 = sbr.rel (0) target = $region29
  $region28: #{resnet_forward.1} parent=0 // pred_region
    _
  $region29: #{resnet_forward.1} parent=0 // pred_fallthru
    _
  // Predicated region
  $region30: #{resnet_forward.1} parent=0 // pred_check
    _
  $region31: #{resnet_forward.1} parent=0 // pred_check_branch
    %35 = sbr.rel (0) target = $region33
  $region32: #{resnet_forward.1} parent=0 // pred_region
    _
  $region33: #{resnet_forward.1} parent=0 // pred_fallthru
    _
  // Predicated region
  $region34: #{resnet_forward.1} parent=0 // pred_check
    _
  $region35: #{resnet_forward.1} parent=0 // pred_check_branch
    %37 = sbr.rel (0) target = $region37
  $region36: #{resnet_forward.1} parent=0 // pred_region
    _
  $region37: #{resnet_forward.1} parent=0 // pred_fallthru
    _
  // Predicated region
  $region38: #{resnet_forward.1} parent=0 // pred_check
    _
  $region39: #{resnet_forward.1} parent=0 // pred_check_branch
    %39 = sbr.rel (0) target = $region41
  $region40: #{resnet_forward.1} parent=0 // pred_region
    _
  $region41: #{resnet_forward.1} parent=0 // pred_fallthru
    _
  // Predicated region
  $region42: #{resnet_forward.1} parent=0 // pred_check
    _
  $region43: #{resnet_forward.1} parent=0 // pred_check_branch
    %41 = sbr.rel (0) target = $region45
  $region44: #{resnet_forward.1} parent=0 // pred_region
    _
  $region45: #{resnet_forward.1} parent=0 // pred_fallthru
    _
  // Predicated region
  $region46: #{resnet_forward.1} parent=0 // pred_check
    _
  $region47: #{resnet_forward.1} parent=0 // pred_check_branch
    %43 = sbr.rel (0) target = $region49
  $region48: #{resnet_forward.1} parent=0 // pred_region
    _
  $region49: #{resnet_forward.1} parent=0 // pred_fallthru
    _
  // Predicated region
  $region50: #{resnet_forward.1} parent=0 // pred_check
    _
  $region51: #{resnet_forward.1} parent=0 // pred_check_branch
    %45 = sbr.rel (0) target = $region53
  $region52: #{resnet_forward.1} parent=0 // pred_region
    _
  $region53: #{resnet_forward.1} parent=0 // pred_fallthru
    _
  // Predicated region
  $region54: #{resnet_forward.1} parent=0 // pred_check
    _
  $region55: #{resnet_forward.1} parent=0 // pred_check_branch
    %47 = sbr.rel (0) target = $region57
  $region56: #{resnet_forward.1} parent=0 // pred_region
    _
  $region57: #{resnet_forward.1} parent=0 // pred_fallthru
    _
  // Predicated region
  $region58: #{resnet_forward.1} parent=0 // pred_check
    _
  $region59: #{resnet_forward.1} parent=0 // pred_check_branch
    %49 = sbr.rel (0) target = $region61
  $region60: #{resnet_forward.1} parent=0 // pred_region
    _
  $region61: #{resnet_forward.1} parent=0 // pred_fallthru
    _
  %v50 = vld [vmem:[%s0] sm:$0xff]
  %v51 = vld [vmem:[%s0 + $0x8] sm:$0xff]
  %v52 = vld [vmem:[%s0 + $0x10] sm:$0xff]
  %v53 = vld [vmem:[%s0 + $0x18] sm:$0xff]
  %54 = vst [vmem:[#allocation2] sm:$0xff] 0.0
  %55 = vst [vmem:[#allocation2 + $0x8] sm:$0xff] 0.0
  %56 = vst [vmem:[#allocation2 + $0x10] sm:$0xff] 0.0
  %57 = vst [vmem:[#allocation2 + $0x18] sm:$0xff] 0.0
  %58 = vst [vmem:[#allocation2 + $0x20] sm:$0xff] 0.0
  %59 = vst [vmem:[#allocation2 + $0x28] sm:$0xff] 0.0
  %60 = vst [vmem:[#allocation2 + $0x8] sm:$0xff] %v50
  %61 = vst [vmem:[#allocation2 + $0x10] sm:$0xff] %v51
  %62 = vst [vmem:[#allocation2 + $0x18] sm:$0xff] %v52
  %63 = vst [vmem:[#allocation2 + $0x20] sm:$0xff] %v53
  %v64 = vld [vmem:[#allocation2] sm:$0xff]
  %v65 = vld [vmem:[#allocation2 + $0x8] sm:$0xff]
  %v66 = vld [vmem:[#allocation2 + $0x10] sm:$0xff]
  %v67 = vld [vmem:[#allocation2 + $0x18] sm:$0xff]
  %v68 = vld [vmem:[#allocation2 + $0x20] sm:$0xff]
  %v69 = vld [vmem:[%s11] ss:$8 sm:$0xf]
  %v71 = vperm.slane %v69, 0
  %v72 = vperm.slane %v69, 1
  %v73 = vperm.slane %v69, 2
  %v74 = vperm.slane %v69, 3
  %75 = vrot.lane.b32.xlu0 %v71, 111
  %v76 = vpop.permute.xlu0 %75
  %77 = vrot.lane.b32.xlu0 %v72, 111
  %v78 = vpop.permute.xlu0 %77
  %79 = vrot.lane.b32.xlu0 %v73, 111
  %v80 = vpop.permute.xlu0 %79
  %81 = vrot.lane.b32.xlu0 %v74, 111
  %v82 = vpop.permute.xlu0 %81
  %vm83 = vcmask 908288
  %v84 = vsel %vm83, %v76, %v78
  %v85 = vsel %vm83, %v78, %v80
  %v86 = vsel %vm83, %v80, %v82
  %v92 = vmul.f32 %v64, %v76
  %v93 = vmul.f32 %v65, %v84
  %v94 = vmul.f32 %v66, %v85
  %v95 = vmul.f32 %v67, %v86
  %v96 = vmul.f32 %v68, %v82
  %s97 = scalar_lea.vmem %s11, 1
  %v98 = vld [vmem:[%s97] ss:$8 sm:$0xf]
  %v100 = vperm.slane %v98, 0
  %v101 = vperm.slane %v98, 1
  %v102 = vperm.slane %v98, 2
  %v103 = vperm.slane %v98, 3
  %104 = vrot.lane.b32.xlu0 %v100, 112
  %v105 = vpop.permute.xlu0 %104
  %106 = vrot.lane.b32.xlu0 %v101, 112
  %v107 = vpop.permute.xlu0 %106
  %108 = vrot.lane.b32.xlu0 %v102, 112
  %v109 = vpop.permute.xlu0 %108
  %110 = vrot.lane.b32.xlu0 %v103, 112
  %v111 = vpop.permute.xlu0 %110
  %vm112 = vcmask 916480
  %v113 = vsel %vm112, %v105, %v107
  %v114 = vsel %vm112, %v107, %v109
  %v115 = vsel %vm112, %v109, %v111
  %v121 = vmul.f32 %v64, %v105
  %v122 = vmul.f32 %v65, %v113
  %v123 = vmul.f32 %v66, %v114
  %v124 = vmul.f32 %v67, %v115
  %v125 = vmul.f32 %v68, %v111
  %s126 = scalar_lea.vmem %s11, 2
  %v127 = vld [vmem:[%s126] ss:$8 sm:$0xf]
  %v129 = vperm.slane %v127, 0
  %v130 = vperm.slane %v127, 1
  %v131 = vperm.slane %v127, 2
  %v132 = vperm.slane %v127, 3
  %133 = vrot.lane.b32.xlu0 %v129, 113
  %v134 = vpop.permute.xlu0 %133
  %135 = vrot.lane.b32.xlu0 %v130, 113
  %v136 = vpop.permute.xlu0 %135
  %137 = vrot.lane.b32.xlu0 %v131, 113
  %v138 = vpop.permute.xlu0 %137
  %139 = vrot.lane.b32.xlu0 %v132, 113
  %v140 = vpop.permute.xlu0 %139
  %vm141 = vcmask 924672
  %v142 = vsel %vm141, %v134, %v136
  %v143 = vsel %vm141, %v136, %v138
  %v144 = vsel %vm141, %v138, %v140
  %v150 = vmul.f32 %v64, %v134
  %v151 = vmul.f32 %v65, %v142
  %v152 = vmul.f32 %v66, %v143
  %v153 = vmul.f32 %v67, %v144
  %v154 = vmul.f32 %v68, %v140
  %s155 = scalar_lea.vmem %s11, 3
  %v156 = vld [vmem:[%s155] ss:$8 sm:$0xf]
  %v158 = vperm.slane %v156, 0
  %v159 = vperm.slane %v156, 1
  %v160 = vperm.slane %v156, 2
  %v161 = vperm.slane %v156, 3
  %162 = vrot.lane.b32.xlu0 %v158, 127
  %v163 = vpop.permute.xlu0 %162
  %164 = vrot.lane.b32.xlu0 %v159, 127
  %v165 = vpop.permute.xlu0 %164
  %166 = vrot.lane.b32.xlu0 %v160, 127
  %v167 = vpop.permute.xlu0 %166
  %168 = vrot.lane.b32.xlu0 %v161, 127
  %v169 = vpop.permute.xlu0 %168
  %vm170 = vcmask 1039360
  %v171 = vsel %vm170, %v163, %v165
  %v172 = vsel %vm170, %v165, %v167
  %v173 = vsel %vm170, %v167, %v169
  %v179 = vmul.f32 %v64, %v163
  %v180 = vmul.f32 %v65, %v171
  %v181 = vmul.f32 %v66, %v172
  %v182 = vmul.f32 %v67, %v173
  %v183 = vmul.f32 %v68, %v169
  %s184 = scalar_lea.vmem %s11, 4
  %v185 = vld [vmem:[%s184] ss:$8 sm:$0xf]
  %v187 = vperm.slane %v185, 0
  %v188 = vperm.slane %v185, 1
  %v189 = vperm.slane %v185, 2
  %v190 = vperm.slane %v185, 3
  %v195 = vmul.f32 %v65, %v187
  %v196 = vmul.f32 %v66, %v188
  %v197 = vmul.f32 %v67, %v189
  %v198 = vmul.f32 %v68, %v190
  %v199 = vld [vmem:[#allocation2 + $0x8] sm:$0xff]
  %v200 = vld [vmem:[#allocation2 + $0x10] sm:$0xff]
  %v201 = vld [vmem:[#allocation2 + $0x18] sm:$0xff]
  %v202 = vld [vmem:[#allocation2 + $0x20] sm:$0xff]
  %v203 = vld [vmem:[#allocation2 + $0x28] sm:$0xff]
  %s204 = scalar_lea.vmem %s11, 5
  %v205 = vld [vmem:[%s204] ss:$8 sm:$0xf]
  %v207 = vperm.slane %v205, 0
  %v208 = vperm.slane %v205, 1
  %v209 = vperm.slane %v205, 2
  %v210 = vperm.slane %v205, 3
  %211 = vrot.lane.b32.xlu0 %v207, 1
  %v212 = vpop.permute.xlu0 %211
  %213 = vrot.lane.b32.xlu0 %v208, 1
  %v214 = vpop.permute.xlu0 %213
  %215 = vrot.lane.b32.xlu0 %v209, 1
  %v216 = vpop.permute.xlu0 %215
  %217 = vrot.lane.b32.xlu0 %v210, 1
  %v218 = vpop.permute.xlu0 %217
  %vm219 = vcmask 7168
  %v220 = vsel %vm219, %v212, %v214
  %v221 = vsel %vm219, %v214, %v216
  %v222 = vsel %vm219, %v216, %v218
  %v228 = vmul.f32 %v199, %v212
  %v229 = vmul.f32 %v200, %v220
  %v230 = vmul.f32 %v201, %v221
  %v231 = vmul.f32 %v202, %v222
  %v232 = vmul.f32 %v203, %v218
  %s233 = scalar_lea.vmem %s11, 6
  %v234 = vld [vmem:[%s233] ss:$8 sm:$0xf]
  %v236 = vperm.slane %v234, 0
  %v237 = vperm.slane %v234, 1
  %v238 = vperm.slane %v234, 2
  %v239 = vperm.slane %v234, 3
  %240 = vrot.lane.b32.xlu0 %v236, 15
  %v241 = vpop.permute.xlu0 %240
  %242 = vrot.lane.b32.xlu0 %v237, 15
  %v243 = vpop.permute.xlu0 %242
  %244 = vrot.lane.b32.xlu0 %v238, 15
  %v245 = vpop.permute.xlu0 %244
  %246 = vrot.lane.b32.xlu0 %v239, 15
  %v247 = vpop.permute.xlu0 %246
  %vm248 = vcmask 121856
  %v249 = vsel %vm248, %v241, %v243
  %v250 = vsel %vm248, %v243, %v245
  %v251 = vsel %vm248, %v245, %v247
  %v257 = vmul.f32 %v199, %v241
  %v258 = vmul.f32 %v200, %v249
  %v259 = vmul.f32 %v201, %v250
  %v260 = vmul.f32 %v202, %v251
  %v261 = vmul.f32 %v203, %v247
  %s262 = scalar_lea.vmem %s11, 7
  %v263 = vld [vmem:[%s262] ss:$8 sm:$0xf]
  %v265 = vperm.slane %v263, 0
  %v266 = vperm.slane %v263, 1
  %v267 = vperm.slane %v263, 2
  %v268 = vperm.slane %v263, 3
  %269 = vrot.lane.b32.xlu0 %v265, 16
  %v270 = vpop.permute.xlu0 %269
  %271 = vrot.lane.b32.xlu0 %v266, 16
  %v272 = vpop.permute.xlu0 %271
  %273 = vrot.lane.b32.xlu0 %v267, 16
  %v274 = vpop.permute.xlu0 %273
  %275 = vrot.lane.b32.xlu0 %v268, 16
  %v276 = vpop.permute.xlu0 %275
  %vm277 = vcmask 130048
  %v278 = vsel %vm277, %v270, %v272
  %v279 = vsel %vm277, %v272, %v274
  %v280 = vsel %vm277, %v274, %v276
  %v286 = vmul.f32 %v199, %v270
  %v287 = vmul.f32 %v200, %v278
  %v288 = vmul.f32 %v201, %v279
  %v289 = vmul.f32 %v202, %v280
  %v290 = vmul.f32 %v203, %v276
  %s291 = scalar_lea.vmem %s11, 32
  %v292 = vld [vmem:[%s291] ss:$8 sm:$0xf]
  %v294 = vperm.slane %v292, 0
  %v295 = vperm.slane %v292, 1
  %v296 = vperm.slane %v292, 2
  %v297 = vperm.slane %v292, 3
  %298 = vrot.lane.b32.xlu0 %v294, 17
  %v299 = vpop.permute.xlu0 %298
  %300 = vrot.lane.b32.xlu0 %v295, 17
  %v301 = vpop.permute.xlu0 %300
  %302 = vrot.lane.b32.xlu0 %v296, 17
  %v303 = vpop.permute.xlu0 %302
  %304 = vrot.lane.b32.xlu0 %v297, 17
  %v305 = vpop.permute.xlu0 %304
  %vm306 = vcmask 138240
  %v307 = vsel %vm306, %v299, %v301
  %v308 = vsel %vm306, %v301, %v303
  %v309 = vsel %vm306, %v303, %v305
  %v315 = vmul.f32 %v199, %v299
  %v316 = vmul.f32 %v200, %v307
  %v317 = vmul.f32 %v201, %v308
  %v318 = vmul.f32 %v202, %v309
  %v319 = vmul.f32 %v203, %v305
  %325 = vrot.lane.b32.xlu0 %v121, 127
  %v326 = vpop.permute.xlu0 %325
  %327 = vrot.lane.b32.xlu0 %v122, 127
  %v328 = vpop.permute.xlu0 %327
  %329 = vrot.lane.b32.xlu0 %v123, 127
  %v330 = vpop.permute.xlu0 %329
  %331 = vrot.lane.b32.xlu0 %v124, 127
  %v332 = vpop.permute.xlu0 %331
  %333 = vrot.lane.b32.xlu0 %v125, 127
  %v334 = vpop.permute.xlu0 %333
  %v335 = vsel %vm170, %v326, %v328
  %v336 = vsel %vm170, %v328, %v330
  %v337 = vsel %vm170, %v330, %v332
  %v338 = vsel %vm170, %v332, %v334
  %344 = vrot.lane.b32.xlu0 %v150, 126
  %v345 = vpop.permute.xlu0 %344
  %346 = vrot.lane.b32.xlu0 %v151, 126
  %v347 = vpop.permute.xlu0 %346
  %348 = vrot.lane.b32.xlu0 %v152, 126
  %v349 = vpop.permute.xlu0 %348
  %350 = vrot.lane.b32.xlu0 %v153, 126
  %v351 = vpop.permute.xlu0 %350
  %352 = vrot.lane.b32.xlu0 %v154, 126
  %v353 = vpop.permute.xlu0 %352
  %vm354 = vcmask 1031168
  %v355 = vsel %vm354, %v345, %v347
  %v356 = vsel %vm354, %v347, %v349
  %v357 = vsel %vm354, %v349, %v351
  %v358 = vsel %vm354, %v351, %v353
  %364 = vrot.lane.b32.xlu0 %v179, 112
  %v365 = vpop.permute.xlu0 %364
  %366 = vrot.lane.b32.xlu0 %v180, 112
  %v367 = vpop.permute.xlu0 %366
  %368 = vrot.lane.b32.xlu0 %v181, 112
  %v369 = vpop.permute.xlu0 %368
  %370 = vrot.lane.b32.xlu0 %v182, 112
  %v371 = vpop.permute.xlu0 %370
  %372 = vrot.lane.b32.xlu0 %v183, 112
  %v373 = vpop.permute.xlu0 %372
  %v374 = vsel %vm112, %v365, %v367
  %v375 = vsel %vm112, %v367, %v369
  %v376 = vsel %vm112, %v369, %v371
  %v377 = vsel %vm112, %v371, %v373
  %382 = vrot.lane.b32.xlu0 %v195, 111
  %v383 = vpop.permute.xlu0 %382
  %384 = vrot.lane.b32.xlu0 %v196, 111
  %v385 = vpop.permute.xlu0 %384
  %386 = vrot.lane.b32.xlu0 %v197, 111
  %v387 = vpop.permute.xlu0 %386
  %388 = vrot.lane.b32.xlu0 %v198, 111
  %v389 = vpop.permute.xlu0 %388
  %v390 = vsel %vm83, %v383, %v385
  %v391 = vsel %vm83, %v385, %v387
  %v392 = vsel %vm83, %v387, %v389
  %398 = vrot.lane.b32.xlu0 %v228, 110
  %v399 = vpop.permute.xlu0 %398
  %400 = vrot.lane.b32.xlu0 %v229, 110
  %v401 = vpop.permute.xlu0 %400
  %402 = vrot.lane.b32.xlu0 %v230, 110
  %v403 = vpop.permute.xlu0 %402
  %404 = vrot.lane.b32.xlu0 %v231, 110
  %v405 = vpop.permute.xlu0 %404
  %406 = vrot.lane.b32.xlu0 %v232, 110
  %v407 = vpop.permute.xlu0 %406
  %vm408 = vcmask 900096
  %v409 = vsel %vm408, %v399, %v401
  %v410 = vsel %vm408, %v401, %v403
  %v411 = vsel %vm408, %v403, %v405
  %v412 = vsel %vm408, %v405, %v407
  %418 = vrot.lane.b32.xlu0 %v257, 96
  %v419 = vpop.permute.xlu0 %418
  %420 = vrot.lane.b32.xlu0 %v258, 96
  %v421 = vpop.permute.xlu0 %420
  %422 = vrot.lane.b32.xlu0 %v259, 96
  %v423 = vpop.permute.xlu0 %422
  %424 = vrot.lane.b32.xlu0 %v260, 96
  %v425 = vpop.permute.xlu0 %424
  %426 = vrot.lane.b32.xlu0 %v261, 96
  %v427 = vpop.permute.xlu0 %426
  %vm428 = vcmask 785408
  %v429 = vsel %vm428, %v419, %v421
  %v430 = vsel %vm428, %v421, %v423
  %v431 = vsel %vm428, %v423, %v425
  %v432 = vsel %vm428, %v425, %v427
  %438 = vrot.lane.b32.xlu0 %v286, 95
  %v439 = vpop.permute.xlu0 %438
  %440 = vrot.lane.b32.xlu0 %v287, 95
  %v441 = vpop.permute.xlu0 %440
  %442 = vrot.lane.b32.xlu0 %v288, 95
  %v443 = vpop.permute.xlu0 %442
  %444 = vrot.lane.b32.xlu0 %v289, 95
  %v445 = vpop.permute.xlu0 %444
  %446 = vrot.lane.b32.xlu0 %v290, 95
  %v447 = vpop.permute.xlu0 %446
  %vm448 = vcmask 777216
  %v449 = vsel %vm448, %v439, %v441
  %v450 = vsel %vm448, %v441, %v443
  %v451 = vsel %vm448, %v443, %v445
  %v452 = vsel %vm448, %v445, %v447
  %458 = vrot.lane.b32.xlu0 %v315, 94
  %v459 = vpop.permute.xlu0 %458
  %460 = vrot.lane.b32.xlu0 %v316, 94
  %v461 = vpop.permute.xlu0 %460
  %462 = vrot.lane.b32.xlu0 %v317, 94
  %v463 = vpop.permute.xlu0 %462
  %464 = vrot.lane.b32.xlu0 %v318, 94
  %v465 = vpop.permute.xlu0 %464
  %466 = vrot.lane.b32.xlu0 %v319, 94
  %v467 = vpop.permute.xlu0 %466
  %vm468 = vcmask 769024
  %v469 = vsel %vm468, %v459, %v461
  %v470 = vsel %vm468, %v461, %v463
  %v471 = vsel %vm468, %v463, %v465
  %v472 = vsel %vm468, %v465, %v467
  %v473 = vld [vmem:[%s1] sm:$0xff]
  %v474 = vld [vmem:[%s2] sm:$0xff]
  %476 = vset.pattern.permute.xlu0 0
  %477 = vperm.xlu0 %476, %v474
  %v478 = vpop.permute.xlu0 %477
  %485 = vrot.lane.b32.xlu0 %v92, 17
  %v486 = vpop.permute.xlu0 %485
  %487 = vrot.lane.b32.xlu0 %v93, 17
  %v488 = vpop.permute.xlu0 %487
  %489 = vrot.lane.b32.xlu0 %v94, 17
  %v490 = vpop.permute.xlu0 %489
  %491 = vrot.lane.b32.xlu0 %v95, 17
  %v492 = vpop.permute.xlu0 %491
  %493 = vrot.lane.b32.xlu0 %v96, 17
  %v494 = vpop.permute.xlu0 %493
  %495 = vrot.lane.b32.xlu0 %v335, 17
  %v496 = vpop.permute.xlu0 %495
  %497 = vrot.lane.b32.xlu0 %v336, 17
  %v498 = vpop.permute.xlu0 %497
  %499 = vrot.lane.b32.xlu0 %v337, 17
  %v500 = vpop.permute.xlu0 %499
  %501 = vrot.lane.b32.xlu0 %v338, 17
  %v502 = vpop.permute.xlu0 %501
  %503 = vrot.lane.b32.xlu0 %v334, 17
  %v504 = vpop.permute.xlu0 %503
  %505 = vrot.lane.b32.xlu0 %v355, 17
  %v506 = vpop.permute.xlu0 %505
  %507 = vrot.lane.b32.xlu0 %v356, 17
  %v508 = vpop.permute.xlu0 %507
  %509 = vrot.lane.b32.xlu0 %v357, 17
  %v510 = vpop.permute.xlu0 %509
  %511 = vrot.lane.b32.xlu0 %v358, 17
  %v512 = vpop.permute.xlu0 %511
  %513 = vrot.lane.b32.xlu0 %v353, 17
  %v514 = vpop.permute.xlu0 %513
  %515 = vrot.lane.b32.xlu0 %v374, 17
  %v516 = vpop.permute.xlu0 %515
  %517 = vrot.lane.b32.xlu0 %v375, 17
  %v518 = vpop.permute.xlu0 %517
  %519 = vrot.lane.b32.xlu0 %v376, 17
  %v520 = vpop.permute.xlu0 %519
  %521 = vrot.lane.b32.xlu0 %v377, 17
  %v522 = vpop.permute.xlu0 %521
  %523 = vrot.lane.b32.xlu0 %v373, 17
  %v524 = vpop.permute.xlu0 %523
  %525 = vrot.lane.b32.xlu0 %v383, 17
  %v526 = vpop.permute.xlu0 %525
  %527 = vrot.lane.b32.xlu0 %v390, 17
  %v528 = vpop.permute.xlu0 %527
  %529 = vrot.lane.b32.xlu0 %v391, 17
  %v530 = vpop.permute.xlu0 %529
  %531 = vrot.lane.b32.xlu0 %v392, 17
  %v532 = vpop.permute.xlu0 %531
  %533 = vrot.lane.b32.xlu0 %v389, 17
  %v534 = vpop.permute.xlu0 %533
  %535 = vrot.lane.b32.xlu0 %v399, 17
  %v536 = vpop.permute.xlu0 %535
  %537 = vrot.lane.b32.xlu0 %v409, 17
  %v538 = vpop.permute.xlu0 %537
  %539 = vrot.lane.b32.xlu0 %v410, 17
  %v540 = vpop.permute.xlu0 %539
  %541 = vrot.lane.b32.xlu0 %v411, 17
  %v542 = vpop.permute.xlu0 %541
  %543 = vrot.lane.b32.xlu0 %v412, 17
  %v544 = vpop.permute.xlu0 %543
  %545 = vrot.lane.b32.xlu0 %v419, 17
  %v546 = vpop.permute.xlu0 %545
  %547 = vrot.lane.b32.xlu0 %v429, 17
  %v548 = vpop.permute.xlu0 %547
  %549 = vrot.lane.b32.xlu0 %v430, 17
  %v550 = vpop.permute.xlu0 %549
  %551 = vrot.lane.b32.xlu0 %v431, 17
  %v552 = vpop.permute.xlu0 %551
  %553 = vrot.lane.b32.xlu0 %v432, 17
  %v554 = vpop.permute.xlu0 %553
  %555 = vrot.lane.b32.xlu0 %v439, 17
  %v556 = vpop.permute.xlu0 %555
  %557 = vrot.lane.b32.xlu0 %v449, 17
  %v558 = vpop.permute.xlu0 %557
  %559 = vrot.lane.b32.xlu0 %v450, 17
  %v560 = vpop.permute.xlu0 %559
  %561 = vrot.lane.b32.xlu0 %v451, 17
  %v562 = vpop.permute.xlu0 %561
  %563 = vrot.lane.b32.xlu0 %v452, 17
  %v564 = vpop.permute.xlu0 %563
  %565 = vrot.lane.b32.xlu0 %v459, 17
  %v566 = vpop.permute.xlu0 %565
  %567 = vrot.lane.b32.xlu0 %v469, 17
  %v568 = vpop.permute.xlu0 %567
  %569 = vrot.lane.b32.xlu0 %v470, 17
  %v570 = vpop.permute.xlu0 %569
  %571 = vrot.lane.b32.xlu0 %v471, 17
  %v572 = vpop.permute.xlu0 %571
  %573 = vrot.lane.b32.xlu0 %v472, 17
  %v574 = vpop.permute.xlu0 %573
  %v575 = vsel %vm306, %v486, %v488
  %v576 = vsel %vm306, %v488, %v490
  %v577 = vsel %vm306, %v490, %v492
  %v578 = vsel %vm306, %v492, %v494
  %v579 = vsel %vm306, %v496, %v498
  %v580 = vsel %vm306, %v498, %v500
  %v581 = vsel %vm306, %v500, %v502
  %v582 = vsel %vm306, %v502, %v504
  %v583 = vsel %vm306, %v506, %v508
  %v584 = vsel %vm306, %v508, %v510
  %v585 = vsel %vm306, %v510, %v512
  %v586 = vsel %vm306, %v512, %v514
  %v587 = vsel %vm306, %v516, %v518
  %v588 = vsel %vm306, %v518, %v520
  %v589 = vsel %vm306, %v520, %v522
  %v590 = vsel %vm306, %v522, %v524
  %v591 = vsel %vm306, %v526, %v528
  %v592 = vsel %vm306, %v528, %v530
  %v593 = vsel %vm306, %v530, %v532
  %v594 = vsel %vm306, %v532, %v534
  %v595 = vsel %vm306, %v536, %v538
  %v596 = vsel %vm306, %v538, %v540
  %v597 = vsel %vm306, %v540, %v542
  %v598 = vsel %vm306, %v542, %v544
  %v599 = vsel %vm306, %v546, %v548
  %v600 = vsel %vm306, %v548, %v550
  %v601 = vsel %vm306, %v550, %v552
  %v602 = vsel %vm306, %v552, %v554
  %v603 = vsel %vm306, %v556, %v558
  %v604 = vsel %vm306, %v558, %v560
  %v605 = vsel %vm306, %v560, %v562
  %v606 = vsel %vm306, %v562, %v564
  %v607 = vsel %vm306, %v566, %v568
  %v608 = vsel %vm306, %v568, %v570
  %v609 = vsel %vm306, %v570, %v572
  %v610 = vsel %vm306, %v572, %v574
  %vm647 = vcmask 588800
  %v649 = vsel %vm647, %v473, 0
  %651 = vmatpush.msra.mxu0 0.0
  %652 = vmatpush.msra.mxu0 0.0
  %653 = vmatpush.msra.mxu0 0.0
  %654 = vmatpush.msra.mxu0 0.0
  %655 = vmatpush.msra.mxu0 0.0
  %656 = vmatpush.msra.mxu0 0.0
  %657 = vmatpush.msra.mxu0 0.0
  %658 = vmatpush.msra.mxu0 %v607
  %659 = vmatpush.msra.mxu0 %v603
  %660 = vmatpush.msra.mxu0 %v599
  %661 = vmatpush.msra.mxu0 %v595
  %662 = vmatpush.msra.mxu0 %v591
  %663 = vmatpush.msra.mxu0 %v587
  %664 = vmatpush.msra.mxu0 %v583
  %665 = vmatpush.msra.mxu0 %v579
  %666 = vmatpush.msra.mxu0 %v575
  %667 = vmatmul.f32.gmra.mxu0 %v649
  %v668 = vpop.f32.mrf.mxu0
  %v669 = vadd.f32 %v478, %v668
  %670 = vdwg.mxu0
  %671 = vmatpush.msra.mxu0 0.0
  %672 = vmatpush.msra.mxu0 0.0
  %673 = vmatpush.msra.mxu0 0.0
  %674 = vmatpush.msra.mxu0 0.0
  %675 = vmatpush.msra.mxu0 0.0
  %676 = vmatpush.msra.mxu0 0.0
  %677 = vmatpush.msra.mxu0 0.0
  %678 = vmatpush.msra.mxu0 %v608
  %679 = vmatpush.msra.mxu0 %v604
  %680 = vmatpush.msra.mxu0 %v600
  %681 = vmatpush.msra.mxu0 %v596
  %682 = vmatpush.msra.mxu0 %v592
  %683 = vmatpush.msra.mxu0 %v588
  %684 = vmatpush.msra.mxu0 %v584
  %685 = vmatpush.msra.mxu0 %v580
  %686 = vmatpush.msra.mxu0 %v576
  %687 = vmatmul.f32.gmra.mxu0 %v649
  %v688 = vpop.f32.mrf.mxu0
  %v689 = vadd.f32 %v478, %v688
  %690 = vdwg.mxu0
  %691 = vmatpush.msra.mxu0 0.0
  %692 = vmatpush.msra.mxu0 0.0
  %693 = vmatpush.msra.mxu0 0.0
  %694 = vmatpush.msra.mxu0 0.0
  %695 = vmatpush.msra.mxu0 0.0
  %696 = vmatpush.msra.mxu0 0.0
  %697 = vmatpush.msra.mxu0 0.0
  %698 = vmatpush.msra.mxu0 %v609
  %699 = vmatpush.msra.mxu0 %v605
  %700 = vmatpush.msra.mxu0 %v601
  %701 = vmatpush.msra.mxu0 %v597
  %702 = vmatpush.msra.mxu0 %v593
  %703 = vmatpush.msra.mxu0 %v589
  %704 = vmatpush.msra.mxu0 %v585
  %705 = vmatpush.msra.mxu0 %v581
  %706 = vmatpush.msra.mxu0 %v577
  %707 = vmatmul.f32.gmra.mxu0 %v649
  %v708 = vpop.f32.mrf.mxu0
  %v709 = vadd.f32 %v478, %v708
  %710 = vdwg.mxu0
  %711 = vmatpush.msra.mxu0 0.0
  %712 = vmatpush.msra.mxu0 0.0
  %713 = vmatpush.msra.mxu0 0.0
  %714 = vmatpush.msra.mxu0 0.0
  %715 = vmatpush.msra.mxu0 0.0
  %716 = vmatpush.msra.mxu0 0.0
  %717 = vmatpush.msra.mxu0 0.0
  %718 = vmatpush.msra.mxu0 %v610
  %719 = vmatpush.msra.mxu0 %v606
  %720 = vmatpush.msra.mxu0 %v602
  %721 = vmatpush.msra.mxu0 %v598
  %722 = vmatpush.msra.mxu0 %v594
  %723 = vmatpush.msra.mxu0 %v590
  %724 = vmatpush.msra.mxu0 %v586
  %725 = vmatpush.msra.mxu0 %v582
  %726 = vmatpush.msra.mxu0 %v578
  %727 = vmatmul.f32.gmra.mxu0 %v649
  %v728 = vpop.f32.mrf.mxu0
  %v729 = vadd.f32 %v478, %v728
  %730 = vdwg.mxu0
  %v731 = vmax.f32 %v669, 0.0
  %v732 = vmax.f32 %v689, 0.0
  %v733 = vmax.f32 %v709, 0.0
  %v734 = vmax.f32 %v729, 0.0
  %735 = vst [vmem:[#allocation2] sm:$0xff] 0.0
  %736 = vst [vmem:[#allocation2 + $0x8] sm:$0xff] 0.0
  %737 = vst [vmem:[#allocation2 + $0x10] sm:$0xff] 0.0
  %738 = vst [vmem:[#allocation2 + $0x18] sm:$0xff] 0.0
  %739 = vst [vmem:[#allocation2 + $0x20] sm:$0xff] 0.0
  %740 = vst [vmem:[#allocation2 + $0x28] sm:$0xff] 0.0
  %741 = vst [vmem:[#allocation2 + $0x8] sm:$0xff] %v731
  %742 = vst [vmem:[#allocation2 + $0x10] sm:$0xff] %v732
  %743 = vst [vmem:[#allocation2 + $0x18] sm:$0xff] %v733
  %744 = vst [vmem:[#allocation2 + $0x20] sm:$0xff] %v734
  %v745 = vld [vmem:[#allocation2] sm:$0xff]
  %v746 = vld [vmem:[#allocation2 + $0x8] sm:$0xff]
  %v747 = vld [vmem:[#allocation2 + $0x10] sm:$0xff]
  %v748 = vld [vmem:[#allocation2 + $0x18] sm:$0xff]
  %v749 = vld [vmem:[#allocation2 + $0x20] sm:$0xff]
  %v750 = vld [vmem:[%s11] ss:$8 sm:$0xf]
  %v752 = vperm.slane %v750, 0
  %v753 = vperm.slane %v750, 1
  %v754 = vperm.slane %v750, 2
  %v755 = vperm.slane %v750, 3
  %756 = vrot.lane.b32.xlu0 %v752, 111
  %v757 = vpop.permute.xlu0 %756
  %758 = vrot.lane.b32.xlu0 %v753, 111
  %v759 = vpop.permute.xlu0 %758
  %760 = vrot.lane.b32.xlu0 %v754, 111
  %v761 = vpop.permute.xlu0 %760
  %762 = vrot.lane.b32.xlu0 %v755, 111
  %v763 = vpop.permute.xlu0 %762
  %v764 = vsel %vm83, %v757, %v759
  %v765 = vsel %vm83, %v759, %v761
  %v766 = vsel %vm83, %v761, %v763
  %v772 = vmul.f32 %v745, %v757
  %v773 = vmul.f32 %v746, %v764
  %v774 = vmul.f32 %v747, %v765
  %v775 = vmul.f32 %v748, %v766
  %v776 = vmul.f32 %v749, %v763
  %v777 = vld [vmem:[%s97] ss:$8 sm:$0xf]
  %v779 = vperm.slane %v777, 0
  %v780 = vperm.slane %v777, 1
  %v781 = vperm.slane %v777, 2
  %v782 = vperm.slane %v777, 3
  %783 = vrot.lane.b32.xlu0 %v779, 112
  %v784 = vpop.permute.xlu0 %783
  %785 = vrot.lane.b32.xlu0 %v780, 112
  %v786 = vpop.permute.xlu0 %785
  %787 = vrot.lane.b32.xlu0 %v781, 112
  %v788 = vpop.permute.xlu0 %787
  %789 = vrot.lane.b32.xlu0 %v782, 112
  %v790 = vpop.permute.xlu0 %789
  %v791 = vsel %vm112, %v784, %v786
  %v792 = vsel %vm112, %v786, %v788
  %v793 = vsel %vm112, %v788, %v790
  %v799 = vmul.f32 %v745, %v784
  %v800 = vmul.f32 %v746, %v791
  %v801 = vmul.f32 %v747, %v792
  %v802 = vmul.f32 %v748, %v793
  %v803 = vmul.f32 %v749, %v790
  %v804 = vld [vmem:[%s126] ss:$8 sm:$0xf]
  %v806 = vperm.slane %v804, 0
  %v807 = vperm.slane %v804, 1
  %v808 = vperm.slane %v804, 2
  %v809 = vperm.slane %v804, 3
  %810 = vrot.lane.b32.xlu0 %v806, 113
  %v811 = vpop.permute.xlu0 %810
  %812 = vrot.lane.b32.xlu0 %v807, 113
  %v813 = vpop.permute.xlu0 %812
  %814 = vrot.lane.b32.xlu0 %v808, 113
  %v815 = vpop.permute.xlu0 %814
  %816 = vrot.lane.b32.xlu0 %v809, 113
  %v817 = vpop.permute.xlu0 %816
  %v818 = vsel %vm141, %v811, %v813
  %v819 = vsel %vm141, %v813, %v815
  %v820 = vsel %vm141, %v815, %v817
  %v826 = vmul.f32 %v745, %v811
  %v827 = vmul.f32 %v746, %v818
  %v828 = vmul.f32 %v747, %v819
  %v829 = vmul.f32 %v748, %v820
  %v830 = vmul.f32 %v749, %v817
  %v831 = vld [vmem:[%s155] ss:$8 sm:$0xf]
  %v833 = vperm.slane %v831, 0
  %v834 = vperm.slane %v831, 1
  %v835 = vperm.slane %v831, 2
  %v836 = vperm.slane %v831, 3
  %837 = vrot.lane.b32.xlu0 %v833, 127
  %v838 = vpop.permute.xlu0 %837
  %839 = vrot.lane.b32.xlu0 %v834, 127
  %v840 = vpop.permute.xlu0 %839
  %841 = vrot.lane.b32.xlu0 %v835, 127
  %v842 = vpop.permute.xlu0 %841
  %843 = vrot.lane.b32.xlu0 %v836, 127
  %v844 = vpop.permute.xlu0 %843
  %v845 = vsel %vm170, %v838, %v840
  %v846 = vsel %vm170, %v840, %v842
  %v847 = vsel %vm170, %v842, %v844
  %v853 = vmul.f32 %v745, %v838
  %v854 = vmul.f32 %v746, %v845
  %v855 = vmul.f32 %v747, %v846
  %v856 = vmul.f32 %v748, %v847
  %v857 = vmul.f32 %v749, %v844
  %v858 = vld [vmem:[%s184] ss:$8 sm:$0xf]
  %v860 = vperm.slane %v858, 0
  %v861 = vperm.slane %v858, 1
  %v862 = vperm.slane %v858, 2
  %v863 = vperm.slane %v858, 3
  %v868 = vmul.f32 %v746, %v860
  %v869 = vmul.f32 %v747, %v861
  %v870 = vmul.f32 %v748, %v862
  %v871 = vmul.f32 %v749, %v863
  %v872 = vld [vmem:[#allocation2 + $0x8] sm:$0xff]
  %v873 = vld [vmem:[#allocation2 + $0x10] sm:$0xff]
  %v874 = vld [vmem:[#allocation2 + $0x18] sm:$0xff]
  %v875 = vld [vmem:[#allocation2 + $0x20] sm:$0xff]
  %v876 = vld [vmem:[#allocation2 + $0x28] sm:$0xff]
  %v877 = vld [vmem:[%s204] ss:$8 sm:$0xf]
  %v879 = vperm.slane %v877, 0
  %v880 = vperm.slane %v877, 1
  %v881 = vperm.slane %v877, 2
  %v882 = vperm.slane %v877, 3
  %883 = vrot.lane.b32.xlu0 %v879, 1
  %v884 = vpop.permute.xlu0 %883
  %885 = vrot.lane.b32.xlu0 %v880, 1
  %v886 = vpop.permute.xlu0 %885
  %887 = vrot.lane.b32.xlu0 %v881, 1
  %v888 = vpop.permute.xlu0 %887
  %889 = vrot.lane.b32.xlu0 %v882, 1
  %v890 = vpop.permute.xlu0 %889
  %v891 = vsel %vm219, %v884, %v886
  %v892 = vsel %vm219, %v886, %v888
  %v893 = vsel %vm219, %v888, %v890
  %v899 = vmul.f32 %v872, %v884
  %v900 = vmul.f32 %v873, %v891
  %v901 = vmul.f32 %v874, %v892
  %v902 = vmul.f32 %v875, %v893
  %v903 = vmul.f32 %v876, %v890
  %v904 = vld [vmem:[%s233] ss:$8 sm:$0xf]
  %v906 = vperm.slane %v904, 0
  %v907 = vperm.slane %v904, 1
  %v908 = vperm.slane %v904, 2
  %v909 = vperm.slane %v904, 3
  %910 = vrot.lane.b32.xlu0 %v906, 15
  %v911 = vpop.permute.xlu0 %910
  %912 = vrot.lane.b32.xlu0 %v907, 15
  %v913 = vpop.permute.xlu0 %912
  %914 = vrot.lane.b32.xlu0 %v908, 15
  %v915 = vpop.permute.xlu0 %914
  %916 = vrot.lane.b32.xlu0 %v909, 15
  %v917 = vpop.permute.xlu0 %916
  %v918 = vsel %vm248, %v911, %v913
  %v919 = vsel %vm248, %v913, %v915
  %v920 = vsel %vm248, %v915, %v917
  %v926 = vmul.f32 %v872, %v911
  %v927 = vmul.f32 %v873, %v918
  %v928 = vmul.f32 %v874, %v919
  %v929 = vmul.f32 %v875, %v920
  %v930 = vmul.f32 %v876, %v917
  %v931 = vld [vmem:[%s262] ss:$8 sm:$0xf]
  %v933 = vperm.slane %v931, 0
  %v934 = vperm.slane %v931, 1
  %v935 = vperm.slane %v931, 2
  %v936 = vperm.slane %v931, 3
  %937 = vrot.lane.b32.xlu0 %v933, 16
  %v938 = vpop.permute.xlu0 %937
  %939 = vrot.lane.b32.xlu0 %v934, 16
  %v940 = vpop.permute.xlu0 %939
  %941 = vrot.lane.b32.xlu0 %v935, 16
  %v942 = vpop.permute.xlu0 %941
  %943 = vrot.lane.b32.xlu0 %v936, 16
  %v944 = vpop.permute.xlu0 %943
  %v945 = vsel %vm277, %v938, %v940
  %v946 = vsel %vm277, %v940, %v942
  %v947 = vsel %vm277, %v942, %v944
  %v953 = vmul.f32 %v872, %v938
  %v954 = vmul.f32 %v873, %v945
  %v955 = vmul.f32 %v874, %v946
  %v956 = vmul.f32 %v875, %v947
  %v957 = vmul.f32 %v876, %v944
  %v958 = vld [vmem:[%s291] ss:$8 sm:$0xf]
  %v960 = vperm.slane %v958, 0
  %v961 = vperm.slane %v958, 1
  %v962 = vperm.slane %v958, 2
  %v963 = vperm.slane %v958, 3
  %964 = vrot.lane.b32.xlu0 %v960, 17
  %v965 = vpop.permute.xlu0 %964
  %966 = vrot.lane.b32.xlu0 %v961, 17
  %v967 = vpop.permute.xlu0 %966
  %968 = vrot.lane.b32.xlu0 %v962, 17
  %v969 = vpop.permute.xlu0 %968
  %970 = vrot.lane.b32.xlu0 %v963, 17
  %v971 = vpop.permute.xlu0 %970
  %v972 = vsel %vm306, %v965, %v967
  %v973 = vsel %vm306, %v967, %v969
  %v974 = vsel %vm306, %v969, %v971
  %v980 = vmul.f32 %v872, %v965
  %v981 = vmul.f32 %v873, %v972
  %v982 = vmul.f32 %v874, %v973
  %v983 = vmul.f32 %v875, %v974
  %v984 = vmul.f32 %v876, %v971
  %990 = vrot.lane.b32.xlu0 %v799, 127
  %v991 = vpop.permute.xlu0 %990
  %992 = vrot.lane.b32.xlu0 %v800, 127
  %v993 = vpop.permute.xlu0 %992
  %994 = vrot.lane.b32.xlu0 %v801, 127
  %v995 = vpop.permute.xlu0 %994
  %996 = vrot.lane.b32.xlu0 %v802, 127
  %v997 = vpop.permute.xlu0 %996
  %998 = vrot.lane.b32.xlu0 %v803, 127
  %v999 = vpop.permute.xlu0 %998
  %v1000 = vsel %vm170, %v991, %v993
  %v1001 = vsel %vm170, %v993, %v995
  %v1002 = vsel %vm170, %v995, %v997
  %v1003 = vsel %vm170, %v997, %v999
  %1009 = vrot.lane.b32.xlu0 %v826, 126
  %v1010 = vpop.permute.xlu0 %1009
  %1011 = vrot.lane.b32.xlu0 %v827, 126
  %v1012 = vpop.permute.xlu0 %1011
  %1013 = vrot.lane.b32.xlu0 %v828, 126
  %v1014 = vpop.permute.xlu0 %1013
  %1015 = vrot.lane.b32.xlu0 %v829, 126
  %v1016 = vpop.permute.xlu0 %1015
  %1017 = vrot.lane.b32.xlu0 %v830, 126
  %v1018 = vpop.permute.xlu0 %1017
  %v1019 = vsel %vm354, %v1010, %v1012
  %v1020 = vsel %vm354, %v1012, %v1014
  %v1021 = vsel %vm354, %v1014, %v1016
  %v1022 = vsel %vm354, %v1016, %v1018
  %1028 = vrot.lane.b32.xlu0 %v853, 112
  %v1029 = vpop.permute.xlu0 %1028
  %1030 = vrot.lane.b32.xlu0 %v854, 112
  %v1031 = vpop.permute.xlu0 %1030
  %1032 = vrot.lane.b32.xlu0 %v855, 112
  %v1033 = vpop.permute.xlu0 %1032
  %1034 = vrot.lane.b32.xlu0 %v856, 112
  %v1035 = vpop.permute.xlu0 %1034
  %1036 = vrot.lane.b32.xlu0 %v857, 112
  %v1037 = vpop.permute.xlu0 %1036
  %v1038 = vsel %vm112, %v1029, %v1031
  %v1039 = vsel %vm112, %v1031, %v1033
  %v1040 = vsel %vm112, %v1033, %v1035
  %v1041 = vsel %vm112, %v1035, %v1037
  %1046 = vrot.lane.b32.xlu0 %v868, 111
  %v1047 = vpop.permute.xlu0 %1046
  %1048 = vrot.lane.b32.xlu0 %v869, 111
  %v1049 = vpop.permute.xlu0 %1048
  %1050 = vrot.lane.b32.xlu0 %v870, 111
  %v1051 = vpop.permute.xlu0 %1050
  %1052 = vrot.lane.b32.xlu0 %v871, 111
  %v1053 = vpop.permute.xlu0 %1052
  %v1054 = vsel %vm83, %v1047, %v1049
  %v1055 = vsel %vm83, %v1049, %v1051
  %v1056 = vsel %vm83, %v1051, %v1053
  %1062 = vrot.lane.b32.xlu0 %v899, 110
  %v1063 = vpop.permute.xlu0 %1062
  %1064 = vrot.lane.b32.xlu0 %v900, 110
  %v1065 = vpop.permute.xlu0 %1064
  %1066 = vrot.lane.b32.xlu0 %v901, 110
  %v1067 = vpop.permute.xlu0 %1066
  %1068 = vrot.lane.b32.xlu0 %v902, 110
  %v1069 = vpop.permute.xlu0 %1068
  %1070 = vrot.lane.b32.xlu0 %v903, 110
  %v1071 = vpop.permute.xlu0 %1070
  %v1072 = vsel %vm408, %v1063, %v1065
  %v1073 = vsel %vm408, %v1065, %v1067
  %v1074 = vsel %vm408, %v1067, %v1069
  %v1075 = vsel %vm408, %v1069, %v1071
  %1081 = vrot.lane.b32.xlu0 %v926, 96
  %v1082 = vpop.permute.xlu0 %1081
  %1083 = vrot.lane.b32.xlu0 %v927, 96
  %v1084 = vpop.permute.xlu0 %1083
  %1085 = vrot.lane.b32.xlu0 %v928, 96
  %v1086 = vpop.permute.xlu0 %1085
  %1087 = vrot.lane.b32.xlu0 %v929, 96
  %v1088 = vpop.permute.xlu0 %1087
  %1089 = vrot.lane.b32.xlu0 %v930, 96
  %v1090 = vpop.permute.xlu0 %1089
  %v1091 = vsel %vm428, %v1082, %v1084
  %v1092 = vsel %vm428, %v1084, %v1086
  %v1093 = vsel %vm428, %v1086, %v1088
  %v1094 = vsel %vm428, %v1088, %v1090
  %1100 = vrot.lane.b32.xlu0 %v953, 95
  %v1101 = vpop.permute.xlu0 %1100
  %1102 = vrot.lane.b32.xlu0 %v954, 95
  %v1103 = vpop.permute.xlu0 %1102
  %1104 = vrot.lane.b32.xlu0 %v955, 95
  %v1105 = vpop.permute.xlu0 %1104
  %1106 = vrot.lane.b32.xlu0 %v956, 95
  %v1107 = vpop.permute.xlu0 %1106
  %1108 = vrot.lane.b32.xlu0 %v957, 95
  %v1109 = vpop.permute.xlu0 %1108
  %v1110 = vsel %vm448, %v1101, %v1103
  %v1111 = vsel %vm448, %v1103, %v1105
  %v1112 = vsel %vm448, %v1105, %v1107
  %v1113 = vsel %vm448, %v1107, %v1109
  %1119 = vrot.lane.b32.xlu0 %v980, 94
  %v1120 = vpop.permute.xlu0 %1119
  %1121 = vrot.lane.b32.xlu0 %v981, 94
  %v1122 = vpop.permute.xlu0 %1121
  %1123 = vrot.lane.b32.xlu0 %v982, 94
  %v1124 = vpop.permute.xlu0 %1123
  %1125 = vrot.lane.b32.xlu0 %v983, 94
  %v1126 = vpop.permute.xlu0 %1125
  %1127 = vrot.lane.b32.xlu0 %v984, 94
  %v1128 = vpop.permute.xlu0 %1127
  %v1129 = vsel %vm468, %v1120, %v1122
  %v1130 = vsel %vm468, %v1122, %v1124
  %v1131 = vsel %vm468, %v1124, %v1126
  %v1132 = vsel %vm468, %v1126, %v1128
  %v1133 = vld [vmem:[%s3] sm:$0xff]
  %v1134 = vld [vmem:[%s4] sm:$0xff]
  %1136 = vset.pattern.permute.xlu0 0
  %1137 = vperm.xlu0 %1136, %v1134
  %v1138 = vpop.permute.xlu0 %1137
  %1145 = vrot.lane.b32.xlu0 %v772, 17
  %v1146 = vpop.permute.xlu0 %1145
  %1147 = vrot.lane.b32.xlu0 %v773, 17
  %v1148 = vpop.permute.xlu0 %1147
  %1149 = vrot.lane.b32.xlu0 %v774, 17
  %v1150 = vpop.permute.xlu0 %1149
  %1151 = vrot.lane.b32.xlu0 %v775, 17
  %v1152 = vpop.permute.xlu0 %1151
  %1153 = vrot.lane.b32.xlu0 %v776, 17
  %v1154 = vpop.permute.xlu0 %1153
  %1155 = vrot.lane.b32.xlu0 %v1000, 17
  %v1156 = vpop.permute.xlu0 %1155
  %1157 = vrot.lane.b32.xlu0 %v1001, 17
  %v1158 = vpop.permute.xlu0 %1157
  %1159 = vrot.lane.b32.xlu0 %v1002, 17
  %v1160 = vpop.permute.xlu0 %1159
  %1161 = vrot.lane.b32.xlu0 %v1003, 17
  %v1162 = vpop.permute.xlu0 %1161
  %1163 = vrot.lane.b32.xlu0 %v999, 17
  %v1164 = vpop.permute.xlu0 %1163
  %1165 = vrot.lane.b32.xlu0 %v1019, 17
  %v1166 = vpop.permute.xlu0 %1165
  %1167 = vrot.lane.b32.xlu0 %v1020, 17
  %v1168 = vpop.permute.xlu0 %1167
  %1169 = vrot.lane.b32.xlu0 %v1021, 17
  %v1170 = vpop.permute.xlu0 %1169
  %1171 = vrot.lane.b32.xlu0 %v1022, 17
  %v1172 = vpop.permute.xlu0 %1171
  %1173 = vrot.lane.b32.xlu0 %v1018, 17
  %v1174 = vpop.permute.xlu0 %1173
  %1175 = vrot.lane.b32.xlu0 %v1038, 17
  %v1176 = vpop.permute.xlu0 %1175
  %1177 = vrot.lane.b32.xlu0 %v1039, 17
  %v1178 = vpop.permute.xlu0 %1177
  %1179 = vrot.lane.b32.xlu0 %v1040, 17
  %v1180 = vpop.permute.xlu0 %1179
  %1181 = vrot.lane.b32.xlu0 %v1041, 17
  %v1182 = vpop.permute.xlu0 %1181
  %1183 = vrot.lane.b32.xlu0 %v1037, 17
  %v1184 = vpop.permute.xlu0 %1183
  %1185 = vrot.lane.b32.xlu0 %v1047, 17
  %v1186 = vpop.permute.xlu0 %1185
  %1187 = vrot.lane.b32.xlu0 %v1054, 17
  %v1188 = vpop.permute.xlu0 %1187
  %1189 = vrot.lane.b32.xlu0 %v1055, 17
  %v1190 = vpop.permute.xlu0 %1189
  %1191 = vrot.lane.b32.xlu0 %v1056, 17
  %v1192 = vpop.permute.xlu0 %1191
  %1193 = vrot.lane.b32.xlu0 %v1053, 17
  %v1194 = vpop.permute.xlu0 %1193
  %1195 = vrot.lane.b32.xlu0 %v1063, 17
  %v1196 = vpop.permute.xlu0 %1195
  %1197 = vrot.lane.b32.xlu0 %v1072, 17
  %v1198 = vpop.permute.xlu0 %1197
  %1199 = vrot.lane.b32.xlu0 %v1073, 17
  %v1200 = vpop.permute.xlu0 %1199
  %1201 = vrot.lane.b32.xlu0 %v1074, 17
  %v1202 = vpop.permute.xlu0 %1201
  %1203 = vrot.lane.b32.xlu0 %v1075, 17
  %v1204 = vpop.permute.xlu0 %1203
  %1205 = vrot.lane.b32.xlu0 %v1082, 17
  %v1206 = vpop.permute.xlu0 %1205
  %1207 = vrot.lane.b32.xlu0 %v1091, 17
  %v1208 = vpop.permute.xlu0 %1207
  %1209 = vrot.lane.b32.xlu0 %v1092, 17
  %v1210 = vpop.permute.xlu0 %1209
  %1211 = vrot.lane.b32.xlu0 %v1093, 17
  %v1212 = vpop.permute.xlu0 %1211
  %1213 = vrot.lane.b32.xlu0 %v1094, 17
  %v1214 = vpop.permute.xlu0 %1213
  %1215 = vrot.lane.b32.xlu0 %v1101, 17
  %v1216 = vpop.permute.xlu0 %1215
  %1217 = vrot.lane.b32.xlu0 %v1110, 17
  %v1218 = vpop.permute.xlu0 %1217
  %1219 = vrot.lane.b32.xlu0 %v1111, 17
  %v1220 = vpop.permute.xlu0 %1219
  %1221 = vrot.lane.b32.xlu0 %v1112, 17
  %v1222 = vpop.permute.xlu0 %1221
  %1223 = vrot.lane.b32.xlu0 %v1113, 17
  %v1224 = vpop.permute.xlu0 %1223
  %1225 = vrot.lane.b32.xlu0 %v1120, 17
  %v1226 = vpop.permute.xlu0 %1225
  %1227 = vrot.lane.b32.xlu0 %v1129, 17
  %v1228 = vpop.permute.xlu0 %1227
  %1229 = vrot.lane.b32.xlu0 %v1130, 17
  %v1230 = vpop.permute.xlu0 %1229
  %1231 = vrot.lane.b32.xlu0 %v1131, 17
  %v1232 = vpop.permute.xlu0 %1231
  %1233 = vrot.lane.b32.xlu0 %v1132, 17
  %v1234 = vpop.permute.xlu0 %1233
  %v1235 = vsel %vm306, %v1146, %v1148
  %v1236 = vsel %vm306, %v1148, %v1150
  %v1237 = vsel %vm306, %v1150, %v1152
  %v1238 = vsel %vm306, %v1152, %v1154
  %v1239 = vsel %vm306, %v1156, %v1158
  %v1240 = vsel %vm306, %v1158, %v1160
  %v1241 = vsel %vm306, %v1160, %v1162
  %v1242 = vsel %vm306, %v1162, %v1164
  %v1243 = vsel %vm306, %v1166, %v1168
  %v1244 = vsel %vm306, %v1168, %v1170
  %v1245 = vsel %vm306, %v1170, %v1172
  %v1246 = vsel %vm306, %v1172, %v1174
  %v1247 = vsel %vm306, %v1176, %v1178
  %v1248 = vsel %vm306, %v1178, %v1180
  %v1249 = vsel %vm306, %v1180, %v1182
  %v1250 = vsel %vm306, %v1182, %v1184
  %v1251 = vsel %vm306, %v1186, %v1188
  %v1252 = vsel %vm306, %v1188, %v1190
  %v1253 = vsel %vm306, %v1190, %v1192
  %v1254 = vsel %vm306, %v1192, %v1194
  %v1255 = vsel %vm306, %v1196, %v1198
  %v1256 = vsel %vm306, %v1198, %v1200
  %v1257 = vsel %vm306, %v1200, %v1202
  %v1258 = vsel %vm306, %v1202, %v1204
  %v1259 = vsel %vm306, %v1206, %v1208
  %v1260 = vsel %vm306, %v1208, %v1210
  %v1261 = vsel %vm306, %v1210, %v1212
  %v1262 = vsel %vm306, %v1212, %v1214
  %v1263 = vsel %vm306, %v1216, %v1218
  %v1264 = vsel %vm306, %v1218, %v1220
  %v1265 = vsel %vm306, %v1220, %v1222
  %v1266 = vsel %vm306, %v1222, %v1224
  %v1267 = vsel %vm306, %v1226, %v1228
  %v1268 = vsel %vm306, %v1228, %v1230
  %v1269 = vsel %vm306, %v1230, %v1232
  %v1270 = vsel %vm306, %v1232, %v1234
  %v1308 = vsel %vm647, %v1133, 0
  %1310 = vmatpush.msra.mxu0 0.0
  %1311 = vmatpush.msra.mxu0 0.0
  %1312 = vmatpush.msra.mxu0 0.0
  %1313 = vmatpush.msra.mxu0 0.0
  %1314 = vmatpush.msra.mxu0 0.0
  %1315 = vmatpush.msra.mxu0 0.0
  %1316 = vmatpush.msra.mxu0 0.0
  %1317 = vmatpush.msra.mxu0 %v1267
  %1318 = vmatpush.msra.mxu0 %v1263
  %1319 = vmatpush.msra.mxu0 %v1259
  %1320 = vmatpush.msra.mxu0 %v1255
  %1321 = vmatpush.msra.mxu0 %v1251
  %1322 = vmatpush.msra.mxu0 %v1247
  %1323 = vmatpush.msra.mxu0 %v1243
  %1324 = vmatpush.msra.mxu0 %v1239
  %1325 = vmatpush.msra.mxu0 %v1235
  %1326 = vmatmul.f32.gmra.mxu0 %v1308
  %v1327 = vpop.f32.mrf.mxu0
  %v1328 = vadd.f32 %v1138, %v1327
  %1329 = vdwg.mxu0
  %1330 = vmatpush.msra.mxu0 0.0
  %1331 = vmatpush.msra.mxu0 0.0
  %1332 = vmatpush.msra.mxu0 0.0
  %1333 = vmatpush.msra.mxu0 0.0
  %1334 = vmatpush.msra.mxu0 0.0
  %1335 = vmatpush.msra.mxu0 0.0
  %1336 = vmatpush.msra.mxu0 0.0
  %1337 = vmatpush.msra.mxu0 %v1268
  %1338 = vmatpush.msra.mxu0 %v1264
  %1339 = vmatpush.msra.mxu0 %v1260
  %1340 = vmatpush.msra.mxu0 %v1256
  %1341 = vmatpush.msra.mxu0 %v1252
  %1342 = vmatpush.msra.mxu0 %v1248
  %1343 = vmatpush.msra.mxu0 %v1244
  %1344 = vmatpush.msra.mxu0 %v1240
  %1345 = vmatpush.msra.mxu0 %v1236
  %1346 = vmatmul.f32.gmra.mxu0 %v1308
  %v1347 = vpop.f32.mrf.mxu0
  %v1348 = vadd.f32 %v1138, %v1347
  %1349 = vdwg.mxu0
  %1350 = vmatpush.msra.mxu0 0.0
  %1351 = vmatpush.msra.mxu0 0.0
  %1352 = vmatpush.msra.mxu0 0.0
  %1353 = vmatpush.msra.mxu0 0.0
  %1354 = vmatpush.msra.mxu0 0.0
  %1355 = vmatpush.msra.mxu0 0.0
  %1356 = vmatpush.msra.mxu0 0.0
  %1357 = vmatpush.msra.mxu0 %v1269
  %1358 = vmatpush.msra.mxu0 %v1265
  %1359 = vmatpush.msra.mxu0 %v1261
  %1360 = vmatpush.msra.mxu0 %v1257
  %1361 = vmatpush.msra.mxu0 %v1253
  %1362 = vmatpush.msra.mxu0 %v1249
  %1363 = vmatpush.msra.mxu0 %v1245
  %1364 = vmatpush.msra.mxu0 %v1241
  %1365 = vmatpush.msra.mxu0 %v1237
  %1366 = vmatmul.f32.gmra.mxu0 %v1308
  %v1367 = vpop.f32.mrf.mxu0
  %v1368 = vadd.f32 %v1138, %v1367
  %1369 = vdwg.mxu0
  %1370 = vmatpush.msra.mxu0 0.0
  %1371 = vmatpush.msra.mxu0 0.0
  %1372 = vmatpush.msra.mxu0 0.0
  %1373 = vmatpush.msra.mxu0 0.0
  %1374 = vmatpush.msra.mxu0 0.0
  %1375 = vmatpush.msra.mxu0 0.0
  %1376 = vmatpush.msra.mxu0 0.0
  %1377 = vmatpush.msra.mxu0 %v1270
  %1378 = vmatpush.msra.mxu0 %v1266
  %1379 = vmatpush.msra.mxu0 %v1262
  %1380 = vmatpush.msra.mxu0 %v1258
  %1381 = vmatpush.msra.mxu0 %v1254
  %1382 = vmatpush.msra.mxu0 %v1250
  %1383 = vmatpush.msra.mxu0 %v1246
  %1384 = vmatpush.msra.mxu0 %v1242
  %1385 = vmatpush.msra.mxu0 %v1238
  %1386 = vmatmul.f32.gmra.mxu0 %v1308
  %v1387 = vpop.f32.mrf.mxu0
  %v1388 = vadd.f32 %v1138, %v1387
  %1389 = vdwg.mxu0
  %v1390 = vadd.f32 %v1328, %v50
  %v1391 = vadd.f32 %v1348, %v51
  %v1392 = vadd.f32 %v1368, %v52
  %v1393 = vadd.f32 %v1388, %v53
  %v1394 = vmax.f32 %v1390, 0.0
  %v1395 = vmax.f32 %v1391, 0.0
  %v1396 = vmax.f32 %v1392, 0.0
  %v1397 = vmax.f32 %v1393, 0.0
  %v1398 = vld [vmem:[%s13] sm:$0xff]
  %v1399 = vld [vmem:[%s13 + $0x8] sm:$0xff]
  %v1400 = vld [vmem:[%s13 + $0x10] sm:$0xff]
  %v1401 = vld [vmem:[%s13 + $0x18] sm:$0xff]
  %v1402 = vld [vmem:[%s13 + $0x20] sm:$0xff]
  %v1403 = vld [vmem:[%s13 + $0x28] sm:$0xff]
  %v1404 = vld [vmem:[%s13 + $0x30] sm:$0xff]
  %v1405 = vld [vmem:[%s13 + $0x38] sm:$0xff]
  %v1406 = vld [vmem:[%s13 + $0x40] sm:$0xff]
  %v1407 = vld [vmem:[%s13 + $0x48] sm:$0xff]
  %v1408 = vld [vmem:[%s13 + $0x50] sm:$0xff]
  %v1409 = vld [vmem:[%s13 + $0x58] sm:$0xff]
  %v1410 = vld [vmem:[%s13 + $0x60] sm:$0xff]
  %v1411 = vld [vmem:[%s13 + $0x68] sm:$0xff]
  %v1412 = vld [vmem:[%s13 + $0x70] sm:$0xff]
  %v1413 = vld [vmem:[%s13 + $0x78] sm:$0xff]
  %v1414 = vld [vmem:[%s13 + $0x80] sm:$0xff]
  %v1415 = vld [vmem:[%s13 + $0x88] sm:$0xff]
  %v1416 = vld [vmem:[%s13 + $0x90] sm:$0xff]
  %v1417 = vld [vmem:[%s13 + $0x98] sm:$0xff]
  %v1418 = vld [vmem:[%s13 + $0xa0] sm:$0xff]
  %v1419 = vld [vmem:[%s13 + $0xa8] sm:$0xff]
  %v1420 = vld [vmem:[%s13 + $0xb0] sm:$0xff]
  %v1421 = vld [vmem:[%s13 + $0xb8] sm:$0xff]
  %v1422 = vld [vmem:[%s13 + $0xc0] sm:$0xff]
  %v1423 = vld [vmem:[%s13 + $0xc8] sm:$0xff]
  %v1424 = vld [vmem:[%s13 + $0xd0] sm:$0xff]
  %v1425 = vld [vmem:[%s13 + $0xd8] sm:$0xff]
  %v1426 = vld [vmem:[%s13 + $0xe0] sm:$0xff]
  %v1427 = vld [vmem:[%s13 + $0xe8] sm:$0xff]
  %v1428 = vld [vmem:[%s13 + $0xf0] sm:$0xff]
  %v1429 = vld [vmem:[%s13 + $0xf8] sm:$0xff]
  %v1430 = vld [vmem:[%s13 + $0x100] sm:$0xff]
  %v1431 = vld [vmem:[%s13 + $0x108] sm:$0xff]
  %v1432 = vld [vmem:[%s13 + $0x110] sm:$0xff]
  %v1433 = vld [vmem:[%s13 + $0x118] sm:$0xff]
  %v1434 = vld [vmem:[%s13 + $0x120] sm:$0xff]
  %v1435 = vld [vmem:[%s13 + $0x128] sm:$0xff]
  %v1436 = vld [vmem:[%s13 + $0x130] sm:$0xff]
  %v1437 = vld [vmem:[%s13 + $0x138] sm:$0xff]
  %v1438 = vld [vmem:[%s13 + $0x140] sm:$0xff]
  %v1439 = vld [vmem:[%s13 + $0x148] sm:$0xff]
  %v1440 = vld [vmem:[%s13 + $0x150] sm:$0xff]
  %v1441 = vld [vmem:[%s13 + $0x158] sm:$0xff]
  %v1442 = vld [vmem:[%s13 + $0x160] sm:$0xff]
  %v1443 = vld [vmem:[%s13 + $0x168] sm:$0xff]
  %v1444 = vld [vmem:[%s13 + $0x170] sm:$0xff]
  %v1445 = vld [vmem:[%s13 + $0x178] sm:$0xff]
  %v1446 = vld [vmem:[%s13 + $0x180] sm:$0xff]
  %v1447 = vld [vmem:[%s13 + $0x188] sm:$0xff]
  %v1448 = vld [vmem:[%s13 + $0x190] sm:$0xff]
  %v1449 = vld [vmem:[%s13 + $0x198] sm:$0xff]
  %v1450 = vld [vmem:[%s13 + $0x1a0] sm:$0xff]
  %v1451 = vld [vmem:[%s13 + $0x1a8] sm:$0xff]
  %v1452 = vld [vmem:[%s13 + $0x1b0] sm:$0xff]
  %v1453 = vld [vmem:[%s13 + $0x1b8] sm:$0xff]
  %v1454 = vld [vmem:[%s13 + $0x1c0] sm:$0xff]
  %v1455 = vld [vmem:[%s13 + $0x1c8] sm:$0xff]
  %v1456 = vld [vmem:[%s13 + $0x1d0] sm:$0xff]
  %v1457 = vld [vmem:[%s13 + $0x1d8] sm:$0xff]
  %v1458 = vld [vmem:[%s13 + $0x1e0] sm:$0xff]
  %v1459 = vld [vmem:[%s13 + $0x1e8] sm:$0xff]
  %v1460 = vld [vmem:[%s13 + $0x1f0] sm:$0xff]
  %v1461 = vld [vmem:[%s13 + $0x1f8] sm:$0xff]
  %1462 = vst [vmem:[#allocation2] sm:$0xff] 0.0
  %1463 = vst [vmem:[#allocation2 + $0x8] sm:$0xff] 0.0
  %1464 = vst [vmem:[#allocation2 + $0x10] sm:$0xff] 0.0
  %1465 = vst [vmem:[#allocation2 + $0x18] sm:$0xff] 0.0
  %1466 = vst [vmem:[#allocation2 + $0x20] sm:$0xff] 0.0
  %1467 = vst [vmem:[#allocation2 + $0x28] sm:$0xff] 0.0
  %1468 = vst [vmem:[#allocation2 + $0x8] sm:$0xff] %v1394
  %1469 = vst [vmem:[#allocation2 + $0x10] sm:$0xff] %v1395
  %1470 = vst [vmem:[#allocation2 + $0x18] sm:$0xff] %v1396
  %1471 = vst [vmem:[#allocation2 + $0x20] sm:$0xff] %v1397
  %v1472 = vld [vmem:[#allocation2] sm:$0xff]
  %v1473 = vld [vmem:[#allocation2 + $0x8] sm:$0xff]
  %v1474 = vld [vmem:[#allocation2 + $0x10] sm:$0xff]
  %v1475 = vld [vmem:[#allocation2 + $0x18] sm:$0xff]
  %v1476 = vld [vmem:[#allocation2 + $0x20] sm:$0xff]
  %v1477 = vld [vmem:[%s11] ss:$8 sm:$0xf]
  %v1479 = vperm.slane %v1477, 0
  %v1480 = vperm.slane %v1477, 1
  %v1481 = vperm.slane %v1477, 2
  %v1482 = vperm.slane %v1477, 3
  %1483 = vrot.lane.b32.xlu0 %v1479, 111
  %v1484 = vpop.permute.xlu0 %1483
  %1485 = vrot.lane.b32.xlu0 %v1480, 111
  %v1486 = vpop.permute.xlu0 %1485
  %1487 = vrot.lane.b32.xlu0 %v1481, 111
  %v1488 = vpop.permute.xlu0 %1487
  %1489 = vrot.lane.b32.xlu0 %v1482, 111
  %v1490 = vpop.permute.xlu0 %1489
  %v1491 = vsel %vm83, %v1484, %v1486
  %v1492 = vsel %vm83, %v1486, %v1488
  %v1493 = vsel %vm83, %v1488, %v1490
  %v1499 = vmul.f32 %v1472, %v1484
  %v1500 = vmul.f32 %v1473, %v1491
  %v1501 = vmul.f32 %v1474, %v1492
  %v1502 = vmul.f32 %v1475, %v1493
  %v1503 = vmul.f32 %v1476, %v1490
  %v1504 = vld [vmem:[%s97] ss:$8 sm:$0xf]
  %v1506 = vperm.slane %v1504, 0
  %v1507 = vperm.slane %v1504, 1
  %v1508 = vperm.slane %v1504, 2
  %v1509 = vperm.slane %v1504, 3
  %1510 = vrot.lane.b32.xlu0 %v1506, 112
  %v1511 = vpop.permute.xlu0 %1510
  %1512 = vrot.lane.b32.xlu0 %v1507, 112
  %v1513 = vpop.permute.xlu0 %1512
  %1514 = vrot.lane.b32.xlu0 %v1508, 112
  %v1515 = vpop.permute.xlu0 %1514
  %1516 = vrot.lane.b32.xlu0 %v1509, 112
  %v1517 = vpop.permute.xlu0 %1516
  %v1518 = vsel %vm112, %v1511, %v1513
  %v1519 = vsel %vm112, %v1513, %v1515
  %v1520 = vsel %vm112, %v1515, %v1517
  %v1526 = vmul.f32 %v1472, %v1511
  %v1527 = vmul.f32 %v1473, %v1518
  %v1528 = vmul.f32 %v1474, %v1519
  %v1529 = vmul.f32 %v1475, %v1520
  %v1530 = vmul.f32 %v1476, %v1517
  %v1531 = vld [vmem:[%s126] ss:$8 sm:$0xf]
  %v1533 = vperm.slane %v1531, 0
  %v1534 = vperm.slane %v1531, 1
  %v1535 = vperm.slane %v1531, 2
  %v1536 = vperm.slane %v1531, 3
  %1537 = vrot.lane.b32.xlu0 %v1533, 113
  %v1538 = vpop.permute.xlu0 %1537
  %1539 = vrot.lane.b32.xlu0 %v1534, 113
  %v1540 = vpop.permute.xlu0 %1539
  %1541 = vrot.lane.b32.xlu0 %v1535, 113
  %v1542 = vpop.permute.xlu0 %1541
  %1543 = vrot.lane.b32.xlu0 %v1536, 113
  %v1544 = vpop.permute.xlu0 %1543
  %v1545 = vsel %vm141, %v1538, %v1540
  %v1546 = vsel %vm141, %v1540, %v1542
  %v1547 = vsel %vm141, %v1542, %v1544
  %v1553 = vmul.f32 %v1472, %v1538
  %v1554 = vmul.f32 %v1473, %v1545
  %v1555 = vmul.f32 %v1474, %v1546
  %v1556 = vmul.f32 %v1475, %v1547
  %v1557 = vmul.f32 %v1476, %v1544
  %v1558 = vld [vmem:[%s155] ss:$8 sm:$0xf]
  %v1560 = vperm.slane %v1558, 0
  %v1561 = vperm.slane %v1558, 1
  %v1562 = vperm.slane %v1558, 2
  %v1563 = vperm.slane %v1558, 3
  %1564 = vrot.lane.b32.xlu0 %v1560, 127
  %v1565 = vpop.permute.xlu0 %1564
  %1566 = vrot.lane.b32.xlu0 %v1561, 127
  %v1567 = vpop.permute.xlu0 %1566
  %1568 = vrot.lane.b32.xlu0 %v1562, 127
  %v1569 = vpop.permute.xlu0 %1568
  %1570 = vrot.lane.b32.xlu0 %v1563, 127
  %v1571 = vpop.permute.xlu0 %1570
  %v1572 = vsel %vm170, %v1565, %v1567
  %v1573 = vsel %vm170, %v1567, %v1569
  %v1574 = vsel %vm170, %v1569, %v1571
  %v1580 = vmul.f32 %v1472, %v1565
  %v1581 = vmul.f32 %v1473, %v1572
  %v1582 = vmul.f32 %v1474, %v1573
  %v1583 = vmul.f32 %v1475, %v1574
  %v1584 = vmul.f32 %v1476, %v1571
  %v1585 = vld [vmem:[%s184] ss:$8 sm:$0xf]
  %v1587 = vperm.slane %v1585, 0
  %v1588 = vperm.slane %v1585, 1
  %v1589 = vperm.slane %v1585, 2
  %v1590 = vperm.slane %v1585, 3
  %v1595 = vmul.f32 %v1473, %v1587
  %v1596 = vmul.f32 %v1474, %v1588
  %v1597 = vmul.f32 %v1475, %v1589
  %v1598 = vmul.f32 %v1476, %v1590
  %v1599 = vld [vmem:[#allocation2 + $0x8] sm:$0xff]
  %v1600 = vld [vmem:[#allocation2 + $0x10] sm:$0xff]
  %v1601 = vld [vmem:[#allocation2 + $0x18] sm:$0xff]
  %v1602 = vld [vmem:[#allocation2 + $0x20] sm:$0xff]
  %v1603 = vld [vmem:[#allocation2 + $0x28] sm:$0xff]
  %v1604 = vld [vmem:[%s204] ss:$8 sm:$0xf]
  %v1606 = vperm.slane %v1604, 0
  %v1607 = vperm.slane %v1604, 1
  %v1608 = vperm.slane %v1604, 2
  %v1609 = vperm.slane %v1604, 3
  %1610 = vrot.lane.b32.xlu0 %v1606, 1
  %v1611 = vpop.permute.xlu0 %1610
  %1612 = vrot.lane.b32.xlu0 %v1607, 1
  %v1613 = vpop.permute.xlu0 %1612
  %1614 = vrot.lane.b32.xlu0 %v1608, 1
  %v1615 = vpop.permute.xlu0 %1614
  %1616 = vrot.lane.b32.xlu0 %v1609, 1
  %v1617 = vpop.permute.xlu0 %1616
  %v1618 = vsel %vm219, %v1611, %v1613
  %v1619 = vsel %vm219, %v1613, %v1615
  %v1620 = vsel %vm219, %v1615, %v1617
  %v1626 = vmul.f32 %v1599, %v1611
  %v1627 = vmul.f32 %v1600, %v1618
  %v1628 = vmul.f32 %v1601, %v1619
  %v1629 = vmul.f32 %v1602, %v1620
  %v1630 = vmul.f32 %v1603, %v1617
  %v1631 = vld [vmem:[%s233] ss:$8 sm:$0xf]
  %v1633 = vperm.slane %v1631, 0
  %v1634 = vperm.slane %v1631, 1
  %v1635 = vperm.slane %v1631, 2
  %v1636 = vperm.slane %v1631, 3
  %1637 = vrot.lane.b32.xlu0 %v1633, 15
  %v1638 = vpop.permute.xlu0 %1637
  %1639 = vrot.lane.b32.xlu0 %v1634, 15
  %v1640 = vpop.permute.xlu0 %1639
  %1641 = vrot.lane.b32.xlu0 %v1635, 15
  %v1642 = vpop.permute.xlu0 %1641
  %1643 = vrot.lane.b32.xlu0 %v1636, 15
  %v1644 = vpop.permute.xlu0 %1643
  %v1645 = vsel %vm248, %v1638, %v1640
  %v1646 = vsel %vm248, %v1640, %v1642
  %v1647 = vsel %vm248, %v1642, %v1644
  %v1653 = vmul.f32 %v1599, %v1638
  %v1654 = vmul.f32 %v1600, %v1645
  %v1655 = vmul.f32 %v1601, %v1646
  %v1656 = vmul.f32 %v1602, %v1647
  %v1657 = vmul.f32 %v1603, %v1644
  %v1658 = vld [vmem:[%s262] ss:$8 sm:$0xf]
  %v1660 = vperm.slane %v1658, 0
  %v1661 = vperm.slane %v1658, 1
  %v1662 = vperm.slane %v1658, 2
  %v1663 = vperm.slane %v1658, 3
  %1664 = vrot.lane.b32.xlu0 %v1660, 16
  %v1665 = vpop.permute.xlu0 %1664
  %1666 = vrot.lane.b32.xlu0 %v1661, 16
  %v1667 = vpop.permute.xlu0 %1666
  %1668 = vrot.lane.b32.xlu0 %v1662, 16
  %v1669 = vpop.permute.xlu0 %1668
  %1670 = vrot.lane.b32.xlu0 %v1663, 16
  %v1671 = vpop.permute.xlu0 %1670
  %v1672 = vsel %vm277, %v1665, %v1667
  %v1673 = vsel %vm277, %v1667, %v1669
  %v1674 = vsel %vm277, %v1669, %v1671
  %v1680 = vmul.f32 %v1599, %v1665
  %v1681 = vmul.f32 %v1600, %v1672
  %v1682 = vmul.f32 %v1601, %v1673
  %v1683 = vmul.f32 %v1602, %v1674
  %v1684 = vmul.f32 %v1603, %v1671
  %v1685 = vld [vmem:[%s291] ss:$8 sm:$0xf]
  %v1687 = vperm.slane %v1685, 0
  %v1688 = vperm.slane %v1685, 1
  %v1689 = vperm.slane %v1685, 2
  %v1690 = vperm.slane %v1685, 3
  %1691 = vrot.lane.b32.xlu0 %v1687, 17
  %v1692 = vpop.permute.xlu0 %1691
  %1693 = vrot.lane.b32.xlu0 %v1688, 17
  %v1694 = vpop.permute.xlu0 %1693
  %1695 = vrot.lane.b32.xlu0 %v1689, 17
  %v1696 = vpop.permute.xlu0 %1695
  %1697 = vrot.lane.b32.xlu0 %v1690, 17
  %v1698 = vpop.permute.xlu0 %1697
  %v1699 = vsel %vm306, %v1692, %v1694
  %v1700 = vsel %vm306, %v1694, %v1696
  %v1701 = vsel %vm306, %v1696, %v1698
  %v1707 = vmul.f32 %v1599, %v1692
  %v1708 = vmul.f32 %v1600, %v1699
  %v1709 = vmul.f32 %v1601, %v1700
  %v1710 = vmul.f32 %v1602, %v1701
  %v1711 = vmul.f32 %v1603, %v1698
  %1717 = vrot.lane.b32.xlu0 %v1526, 127
  %v1718 = vpop.permute.xlu0 %1717
  %1719 = vrot.lane.b32.xlu0 %v1527, 127
  %v1720 = vpop.permute.xlu0 %1719
  %1721 = vrot.lane.b32.xlu0 %v1528, 127
  %v1722 = vpop.permute.xlu0 %1721
  %1723 = vrot.lane.b32.xlu0 %v1529, 127
  %v1724 = vpop.permute.xlu0 %1723
  %1725 = vrot.lane.b32.xlu0 %v1530, 127
  %v1726 = vpop.permute.xlu0 %1725
  %v1727 = vsel %vm170, %v1718, %v1720
  %v1728 = vsel %vm170, %v1720, %v1722
  %v1729 = vsel %vm170, %v1722, %v1724
  %v1730 = vsel %vm170, %v1724, %v1726
  %1736 = vrot.lane.b32.xlu0 %v1553, 126
  %v1737 = vpop.permute.xlu0 %1736
  %1738 = vrot.lane.b32.xlu0 %v1554, 126
  %v1739 = vpop.permute.xlu0 %1738
  %1740 = vrot.lane.b32.xlu0 %v1555, 126
  %v1741 = vpop.permute.xlu0 %1740
  %1742 = vrot.lane.b32.xlu0 %v1556, 126
  %v1743 = vpop.permute.xlu0 %1742
  %1744 = vrot.lane.b32.xlu0 %v1557, 126
  %v1745 = vpop.permute.xlu0 %1744
  %v1746 = vsel %vm354, %v1737, %v1739
  %v1747 = vsel %vm354, %v1739, %v1741
  %v1748 = vsel %vm354, %v1741, %v1743
  %v1749 = vsel %vm354, %v1743, %v1745
  %1755 = vrot.lane.b32.xlu0 %v1580, 112
  %v1756 = vpop.permute.xlu0 %1755
  %1757 = vrot.lane.b32.xlu0 %v1581, 112
  %v1758 = vpop.permute.xlu0 %1757
  %1759 = vrot.lane.b32.xlu0 %v1582, 112
  %v1760 = vpop.permute.xlu0 %1759
  %1761 = vrot.lane.b32.xlu0 %v1583, 112
  %v1762 = vpop.permute.xlu0 %1761
  %1763 = vrot.lane.b32.xlu0 %v1584, 112
  %v1764 = vpop.permute.xlu0 %1763
  %v1765 = vsel %vm112, %v1756, %v1758
  %v1766 = vsel %vm112, %v1758, %v1760
  %v1767 = vsel %vm112, %v1760, %v1762
  %v1768 = vsel %vm112, %v1762, %v1764
  %1773 = vrot.lane.b32.xlu0 %v1595, 111
  %v1774 = vpop.permute.xlu0 %1773
  %1775 = vrot.lane.b32.xlu0 %v1596, 111
  %v1776 = vpop.permute.xlu0 %1775
  %1777 = vrot.lane.b32.xlu0 %v1597, 111
  %v1778 = vpop.permute.xlu0 %1777
  %1779 = vrot.lane.b32.xlu0 %v1598, 111
  %v1780 = vpop.permute.xlu0 %1779
  %v1781 = vsel %vm83, %v1774, %v1776
  %v1782 = vsel %vm83, %v1776, %v1778
  %v1783 = vsel %vm83, %v1778, %v1780
  %1789 = vrot.lane.b32.xlu0 %v1626, 110
  %v1790 = vpop.permute.xlu0 %1789
  %1791 = vrot.lane.b32.xlu0 %v1627, 110
  %v1792 = vpop.permute.xlu0 %1791
  %1793 = vrot.lane.b32.xlu0 %v1628, 110
  %v1794 = vpop.permute.xlu0 %1793
  %1795 = vrot.lane.b32.xlu0 %v1629, 110
  %v1796 = vpop.permute.xlu0 %1795
  %1797 = vrot.lane.b32.xlu0 %v1630, 110
  %v1798 = vpop.permute.xlu0 %1797
  %v1799 = vsel %vm408, %v1790, %v1792
  %v1800 = vsel %vm408, %v1792, %v1794
  %v1801 = vsel %vm408, %v1794, %v1796
  %v1802 = vsel %vm408, %v1796, %v1798
  %1808 = vrot.lane.b32.xlu0 %v1653, 96
  %v1809 = vpop.permute.xlu0 %1808
  %1810 = vrot.lane.b32.xlu0 %v1654, 96
  %v1811 = vpop.permute.xlu0 %1810
  %1812 = vrot.lane.b32.xlu0 %v1655, 96
  %v1813 = vpop.permute.xlu0 %1812
  %1814 = vrot.lane.b32.xlu0 %v1656, 96
  %v1815 = vpop.permute.xlu0 %1814
  %1816 = vrot.lane.b32.xlu0 %v1657, 96
  %v1817 = vpop.permute.xlu0 %1816
  %v1818 = vsel %vm428, %v1809, %v1811
  %v1819 = vsel %vm428, %v1811, %v1813
  %v1820 = vsel %vm428, %v1813, %v1815
  %v1821 = vsel %vm428, %v1815, %v1817
  %1827 = vrot.lane.b32.xlu0 %v1680, 95
  %v1828 = vpop.permute.xlu0 %1827
  %1829 = vrot.lane.b32.xlu0 %v1681, 95
  %v1830 = vpop.permute.xlu0 %1829
  %1831 = vrot.lane.b32.xlu0 %v1682, 95
  %v1832 = vpop.permute.xlu0 %1831
  %1833 = vrot.lane.b32.xlu0 %v1683, 95
  %v1834 = vpop.permute.xlu0 %1833
  %1835 = vrot.lane.b32.xlu0 %v1684, 95
  %v1836 = vpop.permute.xlu0 %1835
  %v1837 = vsel %vm448, %v1828, %v1830
  %v1838 = vsel %vm448, %v1830, %v1832
  %v1839 = vsel %vm448, %v1832, %v1834
  %v1840 = vsel %vm448, %v1834, %v1836
  %1846 = vrot.lane.b32.xlu0 %v1707, 94
  %v1847 = vpop.permute.xlu0 %1846
  %1848 = vrot.lane.b32.xlu0 %v1708, 94
  %v1849 = vpop.permute.xlu0 %1848
  %1850 = vrot.lane.b32.xlu0 %v1709, 94
  %v1851 = vpop.permute.xlu0 %1850
  %1852 = vrot.lane.b32.xlu0 %v1710, 94
  %v1853 = vpop.permute.xlu0 %1852
  %1854 = vrot.lane.b32.xlu0 %v1711, 94
  %v1855 = vpop.permute.xlu0 %1854
  %v1856 = vsel %vm468, %v1847, %v1849
  %v1857 = vsel %vm468, %v1849, %v1851
  %v1858 = vsel %vm468, %v1851, %v1853
  %v1859 = vsel %vm468, %v1853, %v1855
  %v1860 = vld [vmem:[%s5] sm:$0xff]
  %v1861 = vld [vmem:[%s6] sm:$0xff]
  %1863 = vset.pattern.permute.xlu0 0
  %1864 = vperm.xlu0 %1863, %v1861
  %v1865 = vpop.permute.xlu0 %1864
  %1872 = vrot.lane.b32.xlu0 %v1499, 17
  %v1873 = vpop.permute.xlu0 %1872
  %1874 = vrot.lane.b32.xlu0 %v1500, 17
  %v1875 = vpop.permute.xlu0 %1874
  %1876 = vrot.lane.b32.xlu0 %v1501, 17
  %v1877 = vpop.permute.xlu0 %1876
  %1878 = vrot.lane.b32.xlu0 %v1502, 17
  %v1879 = vpop.permute.xlu0 %1878
  %1880 = vrot.lane.b32.xlu0 %v1503, 17
  %v1881 = vpop.permute.xlu0 %1880
  %1882 = vrot.lane.b32.xlu0 %v1727, 17
  %v1883 = vpop.permute.xlu0 %1882
  %1884 = vrot.lane.b32.xlu0 %v1728, 17
  %v1885 = vpop.permute.xlu0 %1884
  %1886 = vrot.lane.b32.xlu0 %v1729, 17
  %v1887 = vpop.permute.xlu0 %1886
  %1888 = vrot.lane.b32.xlu0 %v1730, 17
  %v1889 = vpop.permute.xlu0 %1888
  %1890 = vrot.lane.b32.xlu0 %v1726, 17
  %v1891 = vpop.permute.xlu0 %1890
  %1892 = vrot.lane.b32.xlu0 %v1746, 17
  %v1893 = vpop.permute.xlu0 %1892
  %1894 = vrot.lane.b32.xlu0 %v1747, 17
  %v1895 = vpop.permute.xlu0 %1894
  %1896 = vrot.lane.b32.xlu0 %v1748, 17
  %v1897 = vpop.permute.xlu0 %1896
  %1898 = vrot.lane.b32.xlu0 %v1749, 17
  %v1899 = vpop.permute.xlu0 %1898
  %1900 = vrot.lane.b32.xlu0 %v1745, 17
  %v1901 = vpop.permute.xlu0 %1900
  %1902 = vrot.lane.b32.xlu0 %v1765, 17
  %v1903 = vpop.permute.xlu0 %1902
  %1904 = vrot.lane.b32.xlu0 %v1766, 17
  %v1905 = vpop.permute.xlu0 %1904
  %1906 = vrot.lane.b32.xlu0 %v1767, 17
  %v1907 = vpop.permute.xlu0 %1906
  %1908 = vrot.lane.b32.xlu0 %v1768, 17
  %v1909 = vpop.permute.xlu0 %1908
  %1910 = vrot.lane.b32.xlu0 %v1764, 17
  %v1911 = vpop.permute.xlu0 %1910
  %1912 = vrot.lane.b32.xlu0 %v1774, 17
  %v1913 = vpop.permute.xlu0 %1912
  %1914 = vrot.lane.b32.xlu0 %v1781, 17
  %v1915 = vpop.permute.xlu0 %1914
  %1916 = vrot.lane.b32.xlu0 %v1782, 17
  %v1917 = vpop.permute.xlu0 %1916
  %1918 = vrot.lane.b32.xlu0 %v1783, 17
  %v1919 = vpop.permute.xlu0 %1918
  %1920 = vrot.lane.b32.xlu0 %v1780, 17
  %v1921 = vpop.permute.xlu0 %1920
  %1922 = vrot.lane.b32.xlu0 %v1790, 17
  %v1923 = vpop.permute.xlu0 %1922
  %1924 = vrot.lane.b32.xlu0 %v1799, 17
  %v1925 = vpop.permute.xlu0 %1924
  %1926 = vrot.lane.b32.xlu0 %v1800, 17
  %v1927 = vpop.permute.xlu0 %1926
  %1928 = vrot.lane.b32.xlu0 %v1801, 17
  %v1929 = vpop.permute.xlu0 %1928
  %1930 = vrot.lane.b32.xlu0 %v1802, 17
  %v1931 = vpop.permute.xlu0 %1930
  %1932 = vrot.lane.b32.xlu0 %v1809, 17
  %v1933 = vpop.permute.xlu0 %1932
  %1934 = vrot.lane.b32.xlu0 %v1818, 17
  %v1935 = vpop.permute.xlu0 %1934
  %1936 = vrot.lane.b32.xlu0 %v1819, 17
  %v1937 = vpop.permute.xlu0 %1936
  %1938 = vrot.lane.b32.xlu0 %v1820, 17
  %v1939 = vpop.permute.xlu0 %1938
  %1940 = vrot.lane.b32.xlu0 %v1821, 17
  %v1941 = vpop.permute.xlu0 %1940
  %1942 = vrot.lane.b32.xlu0 %v1828, 17
  %v1943 = vpop.permute.xlu0 %1942
  %1944 = vrot.lane.b32.xlu0 %v1837, 17
  %v1945 = vpop.permute.xlu0 %1944
  %1946 = vrot.lane.b32.xlu0 %v1838, 17
  %v1947 = vpop.permute.xlu0 %1946
  %1948 = vrot.lane.b32.xlu0 %v1839, 17
  %v1949 = vpop.permute.xlu0 %1948
  %1950 = vrot.lane.b32.xlu0 %v1840, 17
  %v1951 = vpop.permute.xlu0 %1950
  %1952 = vrot.lane.b32.xlu0 %v1847, 17
  %v1953 = vpop.permute.xlu0 %1952
  %1954 = vrot.lane.b32.xlu0 %v1856, 17
  %v1955 = vpop.permute.xlu0 %1954
  %1956 = vrot.lane.b32.xlu0 %v1857, 17
  %v1957 = vpop.permute.xlu0 %1956
  %1958 = vrot.lane.b32.xlu0 %v1858, 17
  %v1959 = vpop.permute.xlu0 %1958
  %1960 = vrot.lane.b32.xlu0 %v1859, 17
  %v1961 = vpop.permute.xlu0 %1960
  %v1962 = vsel %vm306, %v1873, %v1875
  %v1963 = vsel %vm306, %v1875, %v1877
  %v1964 = vsel %vm306, %v1877, %v1879
  %v1965 = vsel %vm306, %v1879, %v1881
  %v1966 = vsel %vm306, %v1883, %v1885
  %v1967 = vsel %vm306, %v1885, %v1887
  %v1968 = vsel %vm306, %v1887, %v1889
  %v1969 = vsel %vm306, %v1889, %v1891
  %v1970 = vsel %vm306, %v1893, %v1895
  %v1971 = vsel %vm306, %v1895, %v1897
  %v1972 = vsel %vm306, %v1897, %v1899
  %v1973 = vsel %vm306, %v1899, %v1901
  %v1974 = vsel %vm306, %v1903, %v1905
  %v1975 = vsel %vm306, %v1905, %v1907
  %v1976 = vsel %vm306, %v1907, %v1909
  %v1977 = vsel %vm306, %v1909, %v1911
  %v1978 = vsel %vm306, %v1913, %v1915
  %v1979 = vsel %vm306, %v1915, %v1917
  %v1980 = vsel %vm306, %v1917, %v1919
  %v1981 = vsel %vm306, %v1919, %v1921
  %v1982 = vsel %vm306, %v1923, %v1925
  %v1983 = vsel %vm306, %v1925, %v1927
  %v1984 = vsel %vm306, %v1927, %v1929
  %v1985 = vsel %vm306, %v1929, %v1931
  %v1986 = vsel %vm306, %v1933, %v1935
  %v1987 = vsel %vm306, %v1935, %v1937
  %v1988 = vsel %vm306, %v1937, %v1939
  %v1989 = vsel %vm306, %v1939, %v1941
  %v1990 = vsel %vm306, %v1943, %v1945
  %v1991 = vsel %vm306, %v1945, %v1947
  %v1992 = vsel %vm306, %v1947, %v1949
  %v1993 = vsel %vm306, %v1949, %v1951
  %v1994 = vsel %vm306, %v1953, %v1955
  %v1995 = vsel %vm306, %v1955, %v1957
  %v1996 = vsel %vm306, %v1957, %v1959
  %v1997 = vsel %vm306, %v1959, %v1961
  %v2035 = vsel %vm647, %v1860, 0
  %2037 = vmatpush.msra.mxu0 0.0
  %2038 = vmatpush.msra.mxu0 0.0
  %2039 = vmatpush.msra.mxu0 0.0
  %2040 = vmatpush.msra.mxu0 0.0
  %2041 = vmatpush.msra.mxu0 0.0
  %2042 = vmatpush.msra.mxu0 0.0
  %2043 = vmatpush.msra.mxu0 0.0
  %2044 = vmatpush.msra.mxu0 %v1994
  %2045 = vmatpush.msra.mxu0 %v1990
  %2046 = vmatpush.msra.mxu0 %v1986
  %2047 = vmatpush.msra.mxu0 %v1982
  %2048 = vmatpush.msra.mxu0 %v1978
  %2049 = vmatpush.msra.mxu0 %v1974
  %2050 = vmatpush.msra.mxu0 %v1970
  %2051 = vmatpush.msra.mxu0 %v1966
  %2052 = vmatpush.msra.mxu0 %v1962
  %2053 = vmatmul.f32.gmra.mxu0 %v2035
  %v2054 = vpop.f32.mrf.mxu0
  %v2055 = vadd.f32 %v1865, %v2054
  %2056 = vdwg.mxu0
  %2057 = vmatpush.msra.mxu0 0.0
  %2058 = vmatpush.msra.mxu0 0.0
  %2059 = vmatpush.msra.mxu0 0.0
  %2060 = vmatpush.msra.mxu0 0.0
  %2061 = vmatpush.msra.mxu0 0.0
  %2062 = vmatpush.msra.mxu0 0.0
  %2063 = vmatpush.msra.mxu0 0.0
  %2064 = vmatpush.msra.mxu0 %v1995
  %2065 = vmatpush.msra.mxu0 %v1991
  %2066 = vmatpush.msra.mxu0 %v1987
  %2067 = vmatpush.msra.mxu0 %v1983
  %2068 = vmatpush.msra.mxu0 %v1979
  %2069 = vmatpush.msra.mxu0 %v1975
  %2070 = vmatpush.msra.mxu0 %v1971
  %2071 = vmatpush.msra.mxu0 %v1967
  %2072 = vmatpush.msra.mxu0 %v1963
  %2073 = vmatmul.f32.gmra.mxu0 %v2035
  %v2074 = vpop.f32.mrf.mxu0
  %v2075 = vadd.f32 %v1865, %v2074
  %2076 = vdwg.mxu0
  %2077 = vmatpush.msra.mxu0 0.0
  %2078 = vmatpush.msra.mxu0 0.0
  %2079 = vmatpush.msra.mxu0 0.0
  %2080 = vmatpush.msra.mxu0 0.0
  %2081 = vmatpush.msra.mxu0 0.0
  %2082 = vmatpush.msra.mxu0 0.0
  %2083 = vmatpush.msra.mxu0 0.0
  %2084 = vmatpush.msra.mxu0 %v1996
  %2085 = vmatpush.msra.mxu0 %v1992
  %2086 = vmatpush.msra.mxu0 %v1988
  %2087 = vmatpush.msra.mxu0 %v1984
  %2088 = vmatpush.msra.mxu0 %v1980
  %2089 = vmatpush.msra.mxu0 %v1976
  %2090 = vmatpush.msra.mxu0 %v1972
  %2091 = vmatpush.msra.mxu0 %v1968
  %2092 = vmatpush.msra.mxu0 %v1964
  %2093 = vmatmul.f32.gmra.mxu0 %v2035
  %v2094 = vpop.f32.mrf.mxu0
  %v2095 = vadd.f32 %v1865, %v2094
  %2096 = vdwg.mxu0
  %2097 = vmatpush.msra.mxu0 0.0
  %2098 = vmatpush.msra.mxu0 0.0
  %2099 = vmatpush.msra.mxu0 0.0
  %2100 = vmatpush.msra.mxu0 0.0
  %2101 = vmatpush.msra.mxu0 0.0
  %2102 = vmatpush.msra.mxu0 0.0
  %2103 = vmatpush.msra.mxu0 0.0
  %2104 = vmatpush.msra.mxu0 %v1997
  %2105 = vmatpush.msra.mxu0 %v1993
  %2106 = vmatpush.msra.mxu0 %v1989
  %2107 = vmatpush.msra.mxu0 %v1985
  %2108 = vmatpush.msra.mxu0 %v1981
  %2109 = vmatpush.msra.mxu0 %v1977
  %2110 = vmatpush.msra.mxu0 %v1973
  %2111 = vmatpush.msra.mxu0 %v1969
  %2112 = vmatpush.msra.mxu0 %v1965
  %2113 = vmatmul.f32.gmra.mxu0 %v2035
  %v2114 = vpop.f32.mrf.mxu0
  %v2115 = vadd.f32 %v1865, %v2114
  %2116 = vdwg.mxu0
  %v2117 = vmax.f32 %v2055, 0.0
  %v2118 = vmax.f32 %v2075, 0.0
  %v2119 = vmax.f32 %v2095, 0.0
  %v2120 = vmax.f32 %v2115, 0.0
  %2121 = vmatpush.msra.mxu0 %v1413
  %2122 = vmatpush.msra.mxu0 %v1412
  %2123 = vmatpush.msra.mxu0 %v1411
  %2124 = vmatpush.msra.mxu0 %v1410
  %2125 = vmatpush.msra.mxu0 %v1409
  %2126 = vmatpush.msra.mxu0 %v1408
  %2127 = vmatpush.msra.mxu0 %v1407
  %2128 = vmatpush.msra.mxu0 %v1406
  %2129 = vmatpush.msra.mxu0 %v1405
  %2130 = vmatpush.msra.mxu0 %v1404
  %2131 = vmatpush.msra.mxu0 %v1403
  %2132 = vmatpush.msra.mxu0 %v1402
  %2133 = vmatpush.msra.mxu0 %v1401
  %2134 = vmatpush.msra.mxu0 %v1400
  %2135 = vmatpush.msra.mxu0 %v1399
  %2136 = vmatpush.msra.mxu0 %v1398
  %2137 = vmatmul.f32.gmra.mxu0 %v2117
  %v2138 = vpop.f32.mrf.mxu0
  %v2139 = vadd.f32 0.0, %v2138
  %2140 = vdwg.mxu0
  %2141 = vmatpush.msra.mxu0 %v1429
  %2142 = vmatpush.msra.mxu0 %v1428
  %2143 = vmatpush.msra.mxu0 %v1427
  %2144 = vmatpush.msra.mxu0 %v1426
  %2145 = vmatpush.msra.mxu0 %v1425
  %2146 = vmatpush.msra.mxu0 %v1424
  %2147 = vmatpush.msra.mxu0 %v1423
  %2148 = vmatpush.msra.mxu0 %v1422
  %2149 = vmatpush.msra.mxu0 %v1421
  %2150 = vmatpush.msra.mxu0 %v1420
  %2151 = vmatpush.msra.mxu0 %v1419
  %2152 = vmatpush.msra.mxu0 %v1418
  %2153 = vmatpush.msra.mxu0 %v1417
  %2154 = vmatpush.msra.mxu0 %v1416
  %2155 = vmatpush.msra.mxu0 %v1415
  %2156 = vmatpush.msra.mxu0 %v1414
  %2157 = vmatmul.f32.gmra.mxu0 %v2118
  %v2158 = vpop.f32.mrf.mxu0
  %v2159 = vadd.f32 %v2139, %v2158
  %2160 = vdwg.mxu0
  %2161 = vmatpush.msra.mxu0 %v1445
  %2162 = vmatpush.msra.mxu0 %v1444
  %2163 = vmatpush.msra.mxu0 %v1443
  %2164 = vmatpush.msra.mxu0 %v1442
  %2165 = vmatpush.msra.mxu0 %v1441
  %2166 = vmatpush.msra.mxu0 %v1440
  %2167 = vmatpush.msra.mxu0 %v1439
  %2168 = vmatpush.msra.mxu0 %v1438
  %2169 = vmatpush.msra.mxu0 %v1437
  %2170 = vmatpush.msra.mxu0 %v1436
  %2171 = vmatpush.msra.mxu0 %v1435
  %2172 = vmatpush.msra.mxu0 %v1434
  %2173 = vmatpush.msra.mxu0 %v1433
  %2174 = vmatpush.msra.mxu0 %v1432
  %2175 = vmatpush.msra.mxu0 %v1431
  %2176 = vmatpush.msra.mxu0 %v1430
  %2177 = vmatmul.f32.gmra.mxu0 %v2119
  %v2178 = vpop.f32.mrf.mxu0
  %v2179 = vadd.f32 %v2159, %v2178
  %2180 = vdwg.mxu0
  %2181 = vmatpush.msra.mxu0 %v1461
  %2182 = vmatpush.msra.mxu0 %v1460
  %2183 = vmatpush.msra.mxu0 %v1459
  %2184 = vmatpush.msra.mxu0 %v1458
  %2185 = vmatpush.msra.mxu0 %v1457
  %2186 = vmatpush.msra.mxu0 %v1456
  %2187 = vmatpush.msra.mxu0 %v1455
  %2188 = vmatpush.msra.mxu0 %v1454
  %2189 = vmatpush.msra.mxu0 %v1453
  %2190 = vmatpush.msra.mxu0 %v1452
  %2191 = vmatpush.msra.mxu0 %v1451
  %2192 = vmatpush.msra.mxu0 %v1450
  %2193 = vmatpush.msra.mxu0 %v1449
  %2194 = vmatpush.msra.mxu0 %v1448
  %2195 = vmatpush.msra.mxu0 %v1447
  %2196 = vmatpush.msra.mxu0 %v1446
  %2197 = vmatmul.f32.gmra.mxu0 %v2120
  %v2198 = vpop.f32.mrf.mxu0
  %v2199 = vadd.f32 %v2179, %v2198
  %2200 = vdwg.mxu0
  %v2201 = vld [vmem:[%s9] sm:$0xff]
  %v2202 = vld [vmem:[%s10] sm:$0xff]
  %2204 = vset.pattern.permute.xlu0 0
  %2205 = vperm.xlu0 %2204, %v2202
  %v2206 = vpop.permute.xlu0 %2205
  %v2209 = vsel %vm647, %v2201, 0
  %2211 = vmatpush.msra.mxu0 0.0
  %2212 = vmatpush.msra.mxu0 0.0
  %2213 = vmatpush.msra.mxu0 0.0
  %2214 = vmatpush.msra.mxu0 0.0
  %2215 = vmatpush.msra.mxu0 0.0
  %2216 = vmatpush.msra.mxu0 0.0
  %2217 = vmatpush.msra.mxu0 0.0
  %2218 = vmatpush.msra.mxu0 %v1994
  %2219 = vmatpush.msra.mxu0 %v1990
  %2220 = vmatpush.msra.mxu0 %v1986
  %2221 = vmatpush.msra.mxu0 %v1982
  %2222 = vmatpush.msra.mxu0 %v1978
  %2223 = vmatpush.msra.mxu0 %v1974
  %2224 = vmatpush.msra.mxu0 %v1970
  %2225 = vmatpush.msra.mxu0 %v1966
  %2226 = vmatpush.msra.mxu0 %v1962
  %2227 = vmatmul.f32.gmra.mxu0 %v2209
  %v2228 = vpop.f32.mrf.mxu0
  %v2229 = vadd.f32 %v2206, %v2228
  %2230 = vdwg.mxu0
  %2231 = vmatpush.msra.mxu0 0.0
  %2232 = vmatpush.msra.mxu0 0.0
  %2233 = vmatpush.msra.mxu0 0.0
  %2234 = vmatpush.msra.mxu0 0.0
  %2235 = vmatpush.msra.mxu0 0.0
  %2236 = vmatpush.msra.mxu0 0.0
  %2237 = vmatpush.msra.mxu0 0.0
  %2238 = vmatpush.msra.mxu0 %v1995
  %2239 = vmatpush.msra.mxu0 %v1991
  %2240 = vmatpush.msra.mxu0 %v1987
  %2241 = vmatpush.msra.mxu0 %v1983
  %2242 = vmatpush.msra.mxu0 %v1979
  %2243 = vmatpush.msra.mxu0 %v1975
  %2244 = vmatpush.msra.mxu0 %v1971
  %2245 = vmatpush.msra.mxu0 %v1967
  %2246 = vmatpush.msra.mxu0 %v1963
  %2247 = vmatmul.f32.gmra.mxu0 %v2209
  %v2248 = vpop.f32.mrf.mxu0
  %v2249 = vadd.f32 %v2206, %v2248
  %2250 = vdwg.mxu0
  %2251 = vmatpush.msra.mxu0 0.0
  %2252 = vmatpush.msra.mxu0 0.0
  %2253 = vmatpush.msra.mxu0 0.0
  %2254 = vmatpush.msra.mxu0 0.0
  %2255 = vmatpush.msra.mxu0 0.0
  %2256 = vmatpush.msra.mxu0 0.0
  %2257 = vmatpush.msra.mxu0 0.0
  %2258 = vmatpush.msra.mxu0 %v1996
  %2259 = vmatpush.msra.mxu0 %v1992
  %2260 = vmatpush.msra.mxu0 %v1988
  %2261 = vmatpush.msra.mxu0 %v1984
  %2262 = vmatpush.msra.mxu0 %v1980
  %2263 = vmatpush.msra.mxu0 %v1976
  %2264 = vmatpush.msra.mxu0 %v1972
  %2265 = vmatpush.msra.mxu0 %v1968
  %2266 = vmatpush.msra.mxu0 %v1964
  %2267 = vmatmul.f32.gmra.mxu0 %v2209
  %v2268 = vpop.f32.mrf.mxu0
  %v2269 = vadd.f32 %v2206, %v2268
  %2270 = vdwg.mxu0
  %2271 = vmatpush.msra.mxu0 0.0
  %2272 = vmatpush.msra.mxu0 0.0
  %2273 = vmatpush.msra.mxu0 0.0
  %2274 = vmatpush.msra.mxu0 0.0
  %2275 = vmatpush.msra.mxu0 0.0
  %2276 = vmatpush.msra.mxu0 0.0
  %2277 = vmatpush.msra.mxu0 0.0
  %2278 = vmatpush.msra.mxu0 %v1997
  %2279 = vmatpush.msra.mxu0 %v1993
  %2280 = vmatpush.msra.mxu0 %v1989
  %2281 = vmatpush.msra.mxu0 %v1985
  %2282 = vmatpush.msra.mxu0 %v1981
  %2283 = vmatpush.msra.mxu0 %v1977
  %2284 = vmatpush.msra.mxu0 %v1973
  %2285 = vmatpush.msra.mxu0 %v1969
  %2286 = vmatpush.msra.mxu0 %v1965
  %2287 = vmatmul.f32.gmra.mxu0 %v2209
  %v2288 = vpop.f32.mrf.mxu0
  %v2289 = vadd.f32 %v2206, %v2288
  %2290 = vdwg.mxu0
  %2291 = vmatpush.msra.mxu0 %v1413
  %2292 = vmatpush.msra.mxu0 %v1412
  %2293 = vmatpush.msra.mxu0 %v1411
  %2294 = vmatpush.msra.mxu0 %v1410
  %2295 = vmatpush.msra.mxu0 %v1409
  %2296 = vmatpush.msra.mxu0 %v1408
  %2297 = vmatpush.msra.mxu0 %v1407
  %2298 = vmatpush.msra.mxu0 %v1406
  %2299 = vmatpush.msra.mxu0 %v1405
  %2300 = vmatpush.msra.mxu0 %v1404
  %2301 = vmatpush.msra.mxu0 %v1403
  %2302 = vmatpush.msra.mxu0 %v1402
  %2303 = vmatpush.msra.mxu0 %v1401
  %2304 = vmatpush.msra.mxu0 %v1400
  %2305 = vmatpush.msra.mxu0 %v1399
  %2306 = vmatpush.msra.mxu0 %v1398
  %2307 = vmatmul.f32.gmra.mxu0 %v2229
  %v2308 = vpop.f32.mrf.mxu0
  %v2309 = vadd.f32 0.0, %v2308
  %2310 = vdwg.mxu0
  %2311 = vmatpush.msra.mxu0 %v1429
  %2312 = vmatpush.msra.mxu0 %v1428
  %2313 = vmatpush.msra.mxu0 %v1427
  %2314 = vmatpush.msra.mxu0 %v1426
  %2315 = vmatpush.msra.mxu0 %v1425
  %2316 = vmatpush.msra.mxu0 %v1424
  %2317 = vmatpush.msra.mxu0 %v1423
  %2318 = vmatpush.msra.mxu0 %v1422
  %2319 = vmatpush.msra.mxu0 %v1421
  %2320 = vmatpush.msra.mxu0 %v1420
  %2321 = vmatpush.msra.mxu0 %v1419
  %2322 = vmatpush.msra.mxu0 %v1418
  %2323 = vmatpush.msra.mxu0 %v1417
  %2324 = vmatpush.msra.mxu0 %v1416
  %2325 = vmatpush.msra.mxu0 %v1415
  %2326 = vmatpush.msra.mxu0 %v1414
  %2327 = vmatmul.f32.gmra.mxu0 %v2249
  %v2328 = vpop.f32.mrf.mxu0
  %v2329 = vadd.f32 %v2309, %v2328
  %2330 = vdwg.mxu0
  %2331 = vmatpush.msra.mxu0 %v1445
  %2332 = vmatpush.msra.mxu0 %v1444
  %2333 = vmatpush.msra.mxu0 %v1443
  %2334 = vmatpush.msra.mxu0 %v1442
  %2335 = vmatpush.msra.mxu0 %v1441
  %2336 = vmatpush.msra.mxu0 %v1440
  %2337 = vmatpush.msra.mxu0 %v1439
  %2338 = vmatpush.msra.mxu0 %v1438
  %2339 = vmatpush.msra.mxu0 %v1437
  %2340 = vmatpush.msra.mxu0 %v1436
  %2341 = vmatpush.msra.mxu0 %v1435
  %2342 = vmatpush.msra.mxu0 %v1434
  %2343 = vmatpush.msra.mxu0 %v1433
  %2344 = vmatpush.msra.mxu0 %v1432
  %2345 = vmatpush.msra.mxu0 %v1431
  %2346 = vmatpush.msra.mxu0 %v1430
  %2347 = vmatmul.f32.gmra.mxu0 %v2269
  %v2348 = vpop.f32.mrf.mxu0
  %v2349 = vadd.f32 %v2329, %v2348
  %2350 = vdwg.mxu0
  %2351 = vmatpush.msra.mxu0 %v1461
  %2352 = vmatpush.msra.mxu0 %v1460
  %2353 = vmatpush.msra.mxu0 %v1459
  %2354 = vmatpush.msra.mxu0 %v1458
  %2355 = vmatpush.msra.mxu0 %v1457
  %2356 = vmatpush.msra.mxu0 %v1456
  %2357 = vmatpush.msra.mxu0 %v1455
  %2358 = vmatpush.msra.mxu0 %v1454
  %2359 = vmatpush.msra.mxu0 %v1453
  %2360 = vmatpush.msra.mxu0 %v1452
  %2361 = vmatpush.msra.mxu0 %v1451
  %2362 = vmatpush.msra.mxu0 %v1450
  %2363 = vmatpush.msra.mxu0 %v1449
  %2364 = vmatpush.msra.mxu0 %v1448
  %2365 = vmatpush.msra.mxu0 %v1447
  %2366 = vmatpush.msra.mxu0 %v1446
  %2367 = vmatmul.f32.gmra.mxu0 %v2289
  %v2368 = vpop.f32.mrf.mxu0
  %v2369 = vadd.f32 %v2349, %v2368
  %2370 = vdwg.mxu0
  %2371 = vst [vmem:[#allocation2] sm:$0xff] 0.0
  %2372 = vst [vmem:[#allocation2 + $0x8] sm:$0xff] 0.0
  %2373 = vst [vmem:[#allocation2 + $0x10] sm:$0xff] 0.0
  %2374 = vst [vmem:[#allocation2 + $0x18] sm:$0xff] 0.0
  %2375 = vst [vmem:[#allocation2 + $0x20] sm:$0xff] 0.0
  %2376 = vst [vmem:[#allocation2 + $0x28] sm:$0xff] 0.0
  %2377 = vst [vmem:[#allocation2 + $0x8] sm:$0xff] %v2199
  %v2378 = vld [vmem:[#allocation2] sm:$0xff]
  %v2379 = vld [vmem:[#allocation2 + $0x8] sm:$0xff]
  %v2380 = vld [vmem:[%s12] sm:$0x1]
  %v2381 = vperm.slane %v2380, 0
  %2383 = vrot.lane.b32.xlu0 %v2381, 119
  %v2384 = vpop.permute.xlu0 %2383
  %v2386 = vmul.f32 %v2378, %v2384
  %v2387 = vmul.f32 %v2379, %v2384
  %v2388 = vld [vmem:[%s12 + $0x1] sm:$0x1]
  %v2389 = vperm.slane %v2388, 0
  %2391 = vrot.lane.b32.xlu0 %v2389, 120
  %v2392 = vpop.permute.xlu0 %2391
  %v2394 = vmul.f32 %v2378, %v2392
  %v2395 = vmul.f32 %v2379, %v2392
  %v2396 = vld [vmem:[%s12 + $0x2] sm:$0x1]
  %v2397 = vperm.slane %v2396, 0
  %2399 = vrot.lane.b32.xlu0 %v2397, 121
  %v2400 = vpop.permute.xlu0 %2399
  %v2402 = vmul.f32 %v2378, %v2400
  %v2403 = vmul.f32 %v2379, %v2400
  %v2404 = vld [vmem:[%s12 + $0x3] sm:$0x1]
  %v2405 = vperm.slane %v2404, 0
  %2407 = vrot.lane.b32.xlu0 %v2405, 127
  %v2408 = vpop.permute.xlu0 %2407
  %v2410 = vmul.f32 %v2378, %v2408
  %v2411 = vmul.f32 %v2379, %v2408
  %v2412 = vld [vmem:[%s12 + $0x4] sm:$0x1]
  %v2413 = vperm.slane %v2412, 0
  %v2414 = vmul.f32 %v2379, %v2413
  %v2415 = vld [vmem:[#allocation2 + $0x10] sm:$0xff]
  %v2416 = vld [vmem:[%s12 + $0x5] sm:$0x1]
  %v2417 = vperm.slane %v2416, 0
  %2419 = vrot.lane.b32.xlu0 %v2417, 1
  %v2420 = vpop.permute.xlu0 %2419
  %v2422 = vmul.f32 %v2379, %v2420
  %v2423 = vmul.f32 %v2415, %v2420
  %v2424 = vld [vmem:[%s12 + $0x6] sm:$0x1]
  %v2425 = vperm.slane %v2424, 0
  %2427 = vrot.lane.b32.xlu0 %v2425, 7
  %v2428 = vpop.permute.xlu0 %2427
  %v2430 = vmul.f32 %v2379, %v2428
  %v2431 = vmul.f32 %v2415, %v2428
  %v2432 = vld [vmem:[%s12 + $0x7] sm:$0x1]
  %v2433 = vperm.slane %v2432, 0
  %2435 = vrot.lane.b32.xlu0 %v2433, 8
  %v2436 = vpop.permute.xlu0 %2435
  %v2438 = vmul.f32 %v2379, %v2436
  %v2439 = vmul.f32 %v2415, %v2436
  %v2440 = vld [vmem:[%s12 + $0x8] sm:$0x1]
  %v2441 = vperm.slane %v2440, 0
  %2443 = vrot.lane.b32.xlu0 %v2441, 9
  %v2444 = vpop.permute.xlu0 %2443
  %v2446 = vmul.f32 %v2379, %v2444
  %v2447 = vmul.f32 %v2415, %v2444
  %2450 = vrot.lane.b32.xlu0 %v2394, 127
  %v2451 = vpop.permute.xlu0 %2450
  %2452 = vrot.lane.b32.xlu0 %v2395, 127
  %v2453 = vpop.permute.xlu0 %2452
  %v2454 = vsel %vm170, %v2451, %v2453
  %2457 = vrot.lane.b32.xlu0 %v2402, 126
  %v2458 = vpop.permute.xlu0 %2457
  %2459 = vrot.lane.b32.xlu0 %v2403, 126
  %v2460 = vpop.permute.xlu0 %2459
  %v2461 = vsel %vm354, %v2458, %v2460
  %2464 = vrot.lane.b32.xlu0 %v2410, 120
  %v2465 = vpop.permute.xlu0 %2464
  %2466 = vrot.lane.b32.xlu0 %v2411, 120
  %v2467 = vpop.permute.xlu0 %2466
  %vm2468 = vcmask 982016
  %v2469 = vsel %vm2468, %v2465, %v2467
  %2471 = vrot.lane.b32.xlu0 %v2414, 119
  %v2472 = vpop.permute.xlu0 %2471
  %2475 = vrot.lane.b32.xlu0 %v2422, 118
  %v2476 = vpop.permute.xlu0 %2475
  %2477 = vrot.lane.b32.xlu0 %v2423, 118
  %v2478 = vpop.permute.xlu0 %2477
  %vm2479 = vcmask 965632
  %v2480 = vsel %vm2479, %v2476, %v2478
  %2483 = vrot.lane.b32.xlu0 %v2430, 112
  %v2484 = vpop.permute.xlu0 %2483
  %2485 = vrot.lane.b32.xlu0 %v2431, 112
  %v2486 = vpop.permute.xlu0 %2485
  %v2487 = vsel %vm112, %v2484, %v2486
  %2490 = vrot.lane.b32.xlu0 %v2438, 111
  %v2491 = vpop.permute.xlu0 %2490
  %2492 = vrot.lane.b32.xlu0 %v2439, 111
  %v2493 = vpop.permute.xlu0 %2492
  %v2494 = vsel %vm83, %v2491, %v2493
  %2497 = vrot.lane.b32.xlu0 %v2446, 110
  %v2498 = vpop.permute.xlu0 %2497
  %2499 = vrot.lane.b32.xlu0 %v2447, 110
  %v2500 = vpop.permute.xlu0 %2499
  %v2501 = vsel %vm408, %v2498, %v2500
  %v2502 = vld [vmem:[%s7] sm:$0xff]
  %v2503 = vld [vmem:[%s8] sm:$0xff]
  %2505 = vset.pattern.permute.xlu0 0
  %2506 = vperm.xlu0 %2505, %v2503
  %v2507 = vpop.permute.xlu0 %2506
  %2511 = vrot.lane.b32.xlu0 %v2386, 9
  %v2512 = vpop.permute.xlu0 %2511
  %2513 = vrot.lane.b32.xlu0 %v2387, 9
  %v2514 = vpop.permute.xlu0 %2513
  %2515 = vrot.lane.b32.xlu0 %v2454, 9
  %v2516 = vpop.permute.xlu0 %2515
  %2517 = vrot.lane.b32.xlu0 %v2453, 9
  %v2518 = vpop.permute.xlu0 %2517
  %2519 = vrot.lane.b32.xlu0 %v2461, 9
  %v2520 = vpop.permute.xlu0 %2519
  %2521 = vrot.lane.b32.xlu0 %v2460, 9
  %v2522 = vpop.permute.xlu0 %2521
  %2523 = vrot.lane.b32.xlu0 %v2469, 9
  %v2524 = vpop.permute.xlu0 %2523
  %2525 = vrot.lane.b32.xlu0 %v2467, 9
  %v2526 = vpop.permute.xlu0 %2525
  %2527 = vrot.lane.b32.xlu0 %v2472, 9
  %v2528 = vpop.permute.xlu0 %2527
  %2529 = vrot.lane.b32.xlu0 %v2476, 9
  %v2530 = vpop.permute.xlu0 %2529
  %2531 = vrot.lane.b32.xlu0 %v2480, 9
  %v2532 = vpop.permute.xlu0 %2531
  %2533 = vrot.lane.b32.xlu0 %v2484, 9
  %v2534 = vpop.permute.xlu0 %2533
  %2535 = vrot.lane.b32.xlu0 %v2487, 9
  %v2536 = vpop.permute.xlu0 %2535
  %2537 = vrot.lane.b32.xlu0 %v2491, 9
  %v2538 = vpop.permute.xlu0 %2537
  %2539 = vrot.lane.b32.xlu0 %v2494, 9
  %v2540 = vpop.permute.xlu0 %2539
  %2541 = vrot.lane.b32.xlu0 %v2498, 9
  %v2542 = vpop.permute.xlu0 %2541
  %2543 = vrot.lane.b32.xlu0 %v2501, 9
  %v2544 = vpop.permute.xlu0 %2543
  %vm2545 = vcmask 72704
  %v2546 = vsel %vm2545, %v2512, %v2514
  %v2547 = vsel %vm2545, %v2516, %v2518
  %v2548 = vsel %vm2545, %v2520, %v2522
  %v2549 = vsel %vm2545, %v2524, %v2526
  %v2550 = vsel %vm2545, %v2530, %v2532
  %v2551 = vsel %vm2545, %v2534, %v2536
  %v2552 = vsel %vm2545, %v2538, %v2540
  %v2553 = vsel %vm2545, %v2542, %v2544
  %v2564 = vsel %vm647, %v2502, 0
  %2566 = vmatpush.msra.mxu0 0.0
  %2567 = vmatpush.msra.mxu0 0.0
  %2568 = vmatpush.msra.mxu0 0.0
  %2569 = vmatpush.msra.mxu0 0.0
  %2570 = vmatpush.msra.mxu0 0.0
  %2571 = vmatpush.msra.mxu0 0.0
  %2572 = vmatpush.msra.mxu0 0.0
  %2573 = vmatpush.msra.mxu0 %v2553
  %2574 = vmatpush.msra.mxu0 %v2552
  %2575 = vmatpush.msra.mxu0 %v2551
  %2576 = vmatpush.msra.mxu0 %v2550
  %2577 = vmatpush.msra.mxu0 %v2528
  %2578 = vmatpush.msra.mxu0 %v2549
  %2579 = vmatpush.msra.mxu0 %v2548
  %2580 = vmatpush.msra.mxu0 %v2547
  %2581 = vmatpush.msra.mxu0 %v2546
  %2582 = vmatmul.f32.gmra.mxu0 %v2564
  %v2583 = vpop.f32.mrf.mxu0
  %v2584 = vadd.f32 %v2507, %v2583
  %2585 = vdwg.mxu0
  %v2586 = vadd.f32 %v2584, %v2369
  %v2587 = vmax.f32 %v2586, 0.0
  %v2588 = vld [vmem:[%s14] sm:$0xff]
  %v2589 = vld [vmem:[%s14 + $0x8] sm:$0xff]
  %v2590 = vld [vmem:[%s14 + $0x10] sm:$0xff]
  %v2591 = vld [vmem:[%s14 + $0x18] sm:$0xff]
  %v2592 = vld [vmem:[%s14 + $0x20] sm:$0xff]
  %v2593 = vld [vmem:[%s14 + $0x28] sm:$0xff]
  %v2594 = vld [vmem:[%s14 + $0x30] sm:$0xff]
  %v2595 = vld [vmem:[%s14 + $0x38] sm:$0xff]
  %v2596 = vld [vmem:[%s14 + $0x40] sm:$0xff]
  %v2597 = vld [vmem:[%s14 + $0x48] sm:$0xff]
  %v2598 = vld [vmem:[%s14 + $0x50] sm:$0xff]
  %v2599 = vld [vmem:[%s14 + $0x58] sm:$0xff]
  %v2600 = vld [vmem:[%s14 + $0x60] sm:$0xff]
  %v2601 = vld [vmem:[%s14 + $0x68] sm:$0xff]
  %v2602 = vld [vmem:[%s14 + $0x70] sm:$0xff]
  %v2603 = vld [vmem:[%s14 + $0x78] sm:$0xff]
  %2604 = vmatpush.msra.mxu0 %v2603
  %2605 = vmatpush.msra.mxu0 %v2602
  %2606 = vmatpush.msra.mxu0 %v2601
  %2607 = vmatpush.msra.mxu0 %v2600
  %2608 = vmatpush.msra.mxu0 %v2599
  %2609 = vmatpush.msra.mxu0 %v2598
  %2610 = vmatpush.msra.mxu0 %v2597
  %2611 = vmatpush.msra.mxu0 %v2596
  %2612 = vmatpush.msra.mxu0 %v2595
  %2613 = vmatpush.msra.mxu0 %v2594
  %2614 = vmatpush.msra.mxu0 %v2593
  %2615 = vmatpush.msra.mxu0 %v2592
  %2616 = vmatpush.msra.mxu0 %v2591
  %2617 = vmatpush.msra.mxu0 %v2590
  %2618 = vmatpush.msra.mxu0 %v2589
  %2619 = vmatpush.msra.mxu0 %v2588
  %2620 = vmatmul.f32.gmra.mxu0 %v2587
  %v2621 = vpop.f32.mrf.mxu0
  %v2622 = vadd.f32 0.0, %v2621
  %2623 = vdwg.mxu0
  %vm2624 = vcmask 261120
  %2625 = vst.msk [vmem:[%s15] sm:$0xff] %vm2624, %v2622
  // Predicated region
  $region62: #{resnet_forward.1} parent=0 // pred_check
    _
  $region63: #{resnet_forward.1} parent=0 // pred_check_branch
    %2627 = sbr.rel (0) target = $region65
  $region64: #{resnet_forward.1} parent=0 // pred_region
    _
  $region65: #{resnet_forward.1} parent=0 // pred_fallthru
    _
  // Predicated region
  $region66: #{resnet_forward.1} parent=0 // pred_check
    _
  $region67: #{resnet_forward.1} parent=0 // pred_check_branch
    %2629 = sbr.rel (0) target = $region69
  $region68: #{resnet_forward.1} parent=0 // pred_region
    _
  $region69: #{resnet_forward.1} parent=0 // pred_fallthru
    _

</llo_original>
